<compile_context>
chip_gen: v7x
topology: tpu7x:2x2x1
jax: 0.10.0
libtpu: 0.0.40
codegen_flags: <defaults>
</compile_context>

<pallas_src>
import functools

import jax
import jax.numpy as jnp
from jax.experimental import pallas as pl
from jax.experimental.pallas import tpu as pltpu


IMAGE_SIZE = 32
TOTAL_IMAGE_SIZE = IMAGE_SIZE * IMAGE_SIZE * 3  # 3072
NUM_CLASSES = 2
LANE = 128
NUM_HIDDEN_LAYERS = 8  # L_2 .. L_9


def _round_up(x, m):
    return ((x + m - 1) // m) * m


def _gelu_exact(x):
    # torch.nn.GELU() default is the exact (erf-based) GELU.  Keep in f32.
    # TODO(synk): on v7x, if a bundle dump shows VALU saturating, switch to the
    # tanh-approx GELU (EUP slot) -- small numerics change vs torch, so not the
    # default here.
    return 0.5 * x * (1.0 + jax.lax.erf(x * 0.7071067811865476))


def dnn_kernel(h_ref, w1_ref, wh_ref, wout_ref, out_ref):
    """h_ref:   (TILE_B, 3072) input block, native dtype (f32 or bf16)
    w1_ref:  (3072, Hp)   first layer weight   (VMEM-resident)
    wh_ref:  (8, Hp, Hp)  hidden layer weights (VMEM-resident)
    wout_ref:(Hp, 128)    last layer weight, zero-padded to 128 lanes
    out_ref: (TILE_B, 128) f32 output block (lane-dense; cols >=2 are zero)
    """
    x = h_ref[...]
    # Layer 1: matmul (MXU, f32 accumulation) + exact GELU (f32).
    y = jnp.dot(x.astype(w1_ref.dtype), w1_ref[...],
                preferred_element_type=jnp.float32)
    x = _gelu_exact(y)
    # Layers 2..9.
    for l in range(wh_ref.shape[0]):
        y = jnp.dot(x.astype(wh_ref.dtype), wh_ref[l],
                    preferred_element_type=jnp.float32)
        x = _gelu_exact(y)
    # Layer 10: final linear, no activation.  128-lane dense store.
    out_ref[...] = jnp.dot(x.astype(wout_ref.dtype), wout_ref[...],
                           preferred_element_type=jnp.float32)


def _pad2d(w, rows, cols):
    r, c = w.shape
    if r == rows and c == cols:
        return w
    return jnp.pad(w, ((0, rows - r), (0, cols - c)))


@functools.partial(jax.jit, static_argnames=("tile_b",))
def dnn_forward(z, weights, *, tile_b=1024):
    """z: (..., 3, 32, 32) or (B, 3072) in its native dtype (f32 or bf16).
    weights: list of 10 matrices, each (in, out), any float dtype."""
    h = z.reshape(-1, TOTAL_IMAGE_SIZE)          # free, layout-preserving
    batch = h.shape[0]

    hidden = int(weights[0].shape[1])
    h_pad = _round_up(hidden, LANE)
    out_pad = _round_up(NUM_CLASSES, LANE)

    # Zero-pad weights to lane-aligned shapes (tiny: ~2 MiB for hidden=32).
    # GELU(0)=0 keeps the padded columns identically zero, so real columns
    # are bit-identical to the unpadded computation.
    w1 = _pad2d(weights[0], TOTAL_IMAGE_SIZE, h_pad)
    wh = jnp.stack([_pad2d(w, h_pad, h_pad)
                    for w in weights[1:1 + NUM_HIDDEN_LAYERS]])
    wout = _pad2d(weights[-1], h_pad, out_pad)

    w_itemsize = jnp.dtype(w1.dtype).itemsize
    w_total_bytes = (w1.size + wh.size + wout.size) * w_itemsize
    # VMEM-resident-weights strategy assumes a small hidden size.
    # TODO(synk): add a K/N-tiled fallback for large hidden sizes.
    assert w_total_bytes <= 12 * 1024 * 1024, (
        "hidden_size too large for VMEM-resident weights; needs tiled fallback")

    # --- batch tile selection (no whole-array padding) ---
    tb = max(8, (int(tile_b) // 8) * 8)            # sublane-aligned
    if batch > 16:
        # Ensure >= 2 grid steps so v7x's two TensorCores both get work
        # ("parallel" batch axis); costs ~0.35us/step on single-TC chips.
        tb = min(tb, _round_up(pl.cdiv(batch, 2), 8))
    tb = min(tb, _round_up(batch, 8))
    grid = (pl.cdiv(batch, tb),)

    in_itemsize = jnp.dtype(h.dtype).itemsize
    in_block_bytes = tb * TOTAL_IMAGE_SIZE * in_itemsize
    out_block_bytes = tb * out_pad * 4
    vmem_needed = (2 * in_block_bytes + 2 * w_total_bytes
                   + 2 * out_block_bytes + 8 * 1024 * 1024)
    # Defaults (tb=1024, f32) land around 37 MiB: fits v7x's 64 MiB/TC with
    # headroom; v5e/v6e (128 MiB) can take tile_b=2048 if desired.
    vmem_limit = int(min(96 * 1024 * 1024, max(32 * 1024 * 1024, vmem_needed)))

    # Input block streams per grid step; weights are pinned to block (0,0,...)
    # so they are DMA'd once and stay VMEM-resident across the grid.
    in_specs = [
        pl.BlockSpec((tb, TOTAL_IMAGE_SIZE), lambda i: (i, 0)),
        pl.BlockSpec(w1.shape, lambda i: (0, 0)),
        pl.BlockSpec(wh.shape, lambda i: (0, 0, 0)),
        pl.BlockSpec(wout.shape, lambda i: (0, 0)),
    ]
    out_spec = pl.BlockSpec((tb, out_pad), lambda i: (i, 0))

    flops = 2 * batch * (TOTAL_IMAGE_SIZE * h_pad
                         + NUM_HIDDEN_LAYERS * h_pad * h_pad
                         + h_pad * out_pad)
    transcendentals = batch * (NUM_HIDDEN_LAYERS + 1) * h_pad
    bytes_accessed = (batch * TOTAL_IMAGE_SIZE * in_itemsize
                      + int(w_total_bytes)
                      + batch * out_pad * 4)

    out = pl.pallas_call(
        dnn_kernel,
        out_shape=jax.ShapeDtypeStruct((batch, out_pad), jnp.float32),
        grid=grid,
        in_specs=in_specs,
        out_specs=out_spec,
        compiler_params=pltpu.CompilerParams(
            dimension_semantics=("parallel",),   # megacore split on v7x
            vmem_limit_bytes=vmem_limit,
        ),
        cost_estimate=pl.CostEstimate(
            flops=int(flops),
            transcendentals=int(transcendentals),
            bytes_accessed=int(bytes_accessed),
        ),
    )(h, w1, wh, wout)

    # Lane-dense kernel output -> the module's (B, 2) logits.
    return out[:, :NUM_CLASSES]


def init_weights(hidden_size, key):
    """Deterministic init. Shapes mirror torch.nn.Linear(in, out, bias=False),
    stored transposed as (in, out)."""
    dims = [(TOTAL_IMAGE_SIZE, hidden_size)]
    dims += [(hidden_size, hidden_size)] * NUM_HIDDEN_LAYERS
    dims += [(hidden_size, NUM_CLASSES)]
    weights = []
    for i, (d_in, d_out) in enumerate(dims):
        k = jax.random.fold_in(key, i)
        bound = 1.0 / jnp.sqrt(jnp.float32(d_in))
        w = jax.random.uniform(k, (d_in, d_out), jnp.float32, -bound, bound)
        weights.append(w)
    return weights


def dnn_reference(z, weights):
    """Pure-JAX reference mirroring the kernel's dtype handling
    (per-layer cast to the weight dtype, f32 accumulation, f32 exact GELU)."""
    x = z.reshape(-1, TOTAL_IMAGE_SIZE)
    for w in weights[:-1]:
        y = jnp.dot(x.astype(w.dtype), w, preferred_element_type=jnp.float32)
        x = _gelu_exact(y)
    return jnp.dot(x.astype(weights[-1].dtype), weights[-1],
                   preferred_element_type=jnp.float32)


if __name__ == "__main__":
    key = jax.random.PRNGKey(0)
    hidden_size = 32

    k_w, k_x = jax.random.split(key)
    weights = init_weights(hidden_size, k_w)

    # 1) Small-shape check (batch=2, single tile), f32 semantics of the module.
    z = jax.random.normal(k_x, (2, 3, IMAGE_SIZE, IMAGE_SIZE), jnp.float32)
    out = jax.block_until_ready(dnn_forward(z, weights))
    ref = dnn_reference(z, weights)
    assert out.shape == (2, NUM_CLASSES)
    assert jnp.allclose(out, ref, atol=1e-4, rtol=1e-4), (out, ref)

    # 2) Multi-tile + ragged last tile: batch=40, tile 16 -> grid of 3 blocks
    #    with a partial final block (exercises the no-pad path).
    z2 = jax.random.normal(jax.random.fold_in(key, 7),
                           (40, 3, IMAGE_SIZE, IMAGE_SIZE), jnp.float32)
    out2 = jax.block_until_ready(dnn_forward(z2, weights, tile_b=16))
    ref2 = dnn_reference(z2, weights)
    assert out2.shape == (40, NUM_CLASSES)
    assert jnp.allclose(out2, ref2, atol=1e-4, rtol=1e-4)

    # 3) True bf16 fast path: input already bf16 in HBM (no wrapper convert),
    #    bf16 weights, f32 accumulation in-kernel. Relaxed tolerance.
    z_bf = z2.astype(jnp.bfloat16)
    w_bf = [w.astype(jnp.bfloat16) for w in weights]
    out_bf = jax.block_until_ready(dnn_forward(z_bf, w_bf, tile_b=16))
    ref_bf = dnn_reference(z_bf, w_bf)
    assert jnp.allclose(out_bf, ref_bf, atol=2e-2, rtol=2e-2)

    print("KERNEL_OK")
</pallas_src>

<mosaic_0001>
module attributes {stable_mosaic.version = 11 : i64} {
  func.func @dnn_kernel(%arg0: i32, %arg1: memref<8x3072xf32, #tpu.memory_space<vmem>>, %arg2: memref<3072x128xf32, #tpu.memory_space<vmem>>, %arg3: memref<8x128x128xf32, #tpu.memory_space<vmem>>, %arg4: memref<128x128xf32, #tpu.memory_space<vmem>>, %arg5: memref<8x128xf32, #tpu.memory_space<vmem>>) attributes {dimension_semantics = [#tpu.dimension_semantics<parallel>], iteration_bounds = array<i64: 1>, scalar_prefetch = 0 : i64, scratch_operands = 0 : i64, tpu.core_type = #tpu.core_type<tc>, window_params = [{transform_indices = @transform_0, window_bounds = array<i64: 8, 3072>}, {pipeline_mode = #tpu.pipeline_mode<synchronous>, transform_indices = @transform_1, window_bounds = array<i64: 3072, 128>}, {pipeline_mode = #tpu.pipeline_mode<synchronous>, transform_indices = @transform_2, window_bounds = array<i64: 8, 128, 128>}, {pipeline_mode = #tpu.pipeline_mode<synchronous>, transform_indices = @transform_3, window_bounds = array<i64: 128, 128>}, {transform_indices = @transform_4, window_bounds = array<i64: 8, 128>}]} {
    %c0 = arith.constant 0 : index
    %c0_0 = arith.constant 0 : index
    %0 = vector.load %arg1[%c0, %c0_0] : memref<8x3072xf32, #tpu.memory_space<vmem>>, vector<8x3072xf32>
    %c0_1 = arith.constant 0 : index
    %c0_2 = arith.constant 0 : index
    %1 = vector.load %arg2[%c0_1, %c0_2] : memref<3072x128xf32, #tpu.memory_space<vmem>>, vector<3072x128xf32>
    %cst = arith.constant dense<0.000000e+00> : vector<8x128xf32>
    %2 = tpu.matmul %0, %1, %cst {dimension_numbers = #tpu.dot_dimension_numbers<[1], [0], [0], [1], [0, 0, 1, 1], [], []>} : vector<8x3072xf32>, vector<3072x128xf32>, vector<8x128xf32> -> vector<8x128xf32>
    %cst_3 = arith.constant 5.000000e-01 : f32
    %3 = vector.broadcast %cst_3 : f32 to vector<8x128xf32>
    %4 = arith.mulf %3, %2 : vector<8x128xf32>
    %cst_4 = arith.constant 0.707106769 : f32
    %5 = vector.broadcast %cst_4 : f32 to vector<8x128xf32>
    %6 = arith.mulf %2, %5 : vector<8x128xf32>
    %7 = math.erf %6 : vector<8x128xf32>
    %cst_5 = arith.constant 1.000000e+00 : f32
    %8 = vector.broadcast %cst_5 : f32 to vector<8x128xf32>
    %9 = arith.addf %8, %7 : vector<8x128xf32>
    %10 = arith.mulf %4, %9 : vector<8x128xf32>
    %c0_6 = arith.constant 0 : index
    %c0_7 = arith.constant 0 : index
    %c0_8 = arith.constant 0 : index
    %11 = vector.load %arg3[%c0_6, %c0_7, %c0_8] : memref<8x128x128xf32, #tpu.memory_space<vmem>>, vector<1x128x128xf32>
    %12 = vector.shape_cast %11 : vector<1x128x128xf32> to vector<128x128xf32>
    %cst_9 = arith.constant dense<0.000000e+00> : vector<8x128xf32>
    %13 = tpu.matmul %10, %12, %cst_9 {dimension_numbers = #tpu.dot_dimension_numbers<[1], [0], [0], [1], [0, 0, 1, 1], [], []>} : vector<8x128xf32>, vector<128x128xf32>, vector<8x128xf32> -> vector<8x128xf32>
    %cst_10 = arith.constant 5.000000e-01 : f32
    %14 = vector.broadcast %cst_10 : f32 to vector<8x128xf32>
    %15 = arith.mulf %14, %13 : vector<8x128xf32>
    %cst_11 = arith.constant 0.707106769 : f32
    %16 = vector.broadcast %cst_11 : f32 to vector<8x128xf32>
    %17 = arith.mulf %13, %16 : vector<8x128xf32>
    %18 = math.erf %17 : vector<8x128xf32>
    %cst_12 = arith.constant 1.000000e+00 : f32
    %19 = vector.broadcast %cst_12 : f32 to vector<8x128xf32>
    %20 = arith.addf %19, %18 : vector<8x128xf32>
    %21 = arith.mulf %15, %20 : vector<8x128xf32>
    %c1 = arith.constant 1 : index
    %c0_13 = arith.constant 0 : index
    %c0_14 = arith.constant 0 : index
    %22 = vector.load %arg3[%c1, %c0_13, %c0_14] : memref<8x128x128xf32, #tpu.memory_space<vmem>>, vector<1x128x128xf32>
    %23 = vector.shape_cast %22 : vector<1x128x128xf32> to vector<128x128xf32>
    %cst_15 = arith.constant dense<0.000000e+00> : vector<8x128xf32>
    %24 = tpu.matmul %21, %23, %cst_15 {dimension_numbers = #tpu.dot_dimension_numbers<[1], [0], [0], [1], [0, 0, 1, 1], [], []>} : vector<8x128xf32>, vector<128x128xf32>, vector<8x128xf32> -> vector<8x128xf32>
    %cst_16 = arith.constant 5.000000e-01 : f32
    %25 = vector.broadcast %cst_16 : f32 to vector<8x128xf32>
    %26 = arith.mulf %25, %24 : vector<8x128xf32>
    %cst_17 = arith.constant 0.707106769 : f32
    %27 = vector.broadcast %cst_17 : f32 to vector<8x128xf32>
    %28 = arith.mulf %24, %27 : vector<8x128xf32>
    %29 = math.erf %28 : vector<8x128xf32>
    %cst_18 = arith.constant 1.000000e+00 : f32
    %30 = vector.broadcast %cst_18 : f32 to vector<8x128xf32>
    %31 = arith.addf %30, %29 : vector<8x128xf32>
    %32 = arith.mulf %26, %31 : vector<8x128xf32>
    %c2 = arith.constant 2 : index
    %c0_19 = arith.constant 0 : index
    %c0_20 = arith.constant 0 : index
    %33 = vector.load %arg3[%c2, %c0_19, %c0_20] : memref<8x128x128xf32, #tpu.memory_space<vmem>>, vector<1x128x128xf32>
    %34 = vector.shape_cast %33 : vector<1x128x128xf32> to vector<128x128xf32>
    %cst_21 = arith.constant dense<0.000000e+00> : vector<8x128xf32>
    %35 = tpu.matmul %32, %34, %cst_21 {dimension_numbers = #tpu.dot_dimension_numbers<[1], [0], [0], [1], [0, 0, 1, 1], [], []>} : vector<8x128xf32>, vector<128x128xf32>, vector<8x128xf32> -> vector<8x128xf32>
    %cst_22 = arith.constant 5.000000e-01 : f32
    %36 = vector.broadcast %cst_22 : f32 to vector<8x128xf32>
    %37 = arith.mulf %36, %35 : vector<8x128xf32>
    %cst_23 = arith.constant 0.707106769 : f32
    %38 = vector.broadcast %cst_23 : f32 to vector<8x128xf32>
    %39 = arith.mulf %35, %38 : vector<8x128xf32>
    %40 = math.erf %39 : vector<8x128xf32>
    %cst_24 = arith.constant 1.000000e+00 : f32
    %41 = vector.broadcast %cst_24 : f32 to vector<8x128xf32>
    %42 = arith.addf %41, %40 : vector<8x128xf32>
    %43 = arith.mulf %37, %42 : vector<8x128xf32>
    %c3 = arith.constant 3 : index
    %c0_25 = arith.constant 0 : index
    %c0_26 = arith.constant 0 : index
    %44 = vector.load %arg3[%c3, %c0_25, %c0_26] : memref<8x128x128xf32, #tpu.memory_space<vmem>>, vector<1x128x128xf32>
    %45 = vector.shape_cast %44 : vector<1x128x128xf32> to vector<128x128xf32>
    %cst_27 = arith.constant dense<0.000000e+00> : vector<8x128xf32>
    %46 = tpu.matmul %43, %45, %cst_27 {dimension_numbers = #tpu.dot_dimension_numbers<[1], [0], [0], [1], [0, 0, 1, 1], [], []>} : vector<8x128xf32>, vector<128x128xf32>, vector<8x128xf32> -> vector<8x128xf32>
    %cst_28 = arith.constant 5.000000e-01 : f32
    %47 = vector.broadcast %cst_28 : f32 to vector<8x128xf32>
    %48 = arith.mulf %47, %46 : vector<8x128xf32>
    %cst_29 = arith.constant 0.707106769 : f32
    %49 = vector.broadcast %cst_29 : f32 to vector<8x128xf32>
    %50 = arith.mulf %46, %49 : vector<8x128xf32>
    %51 = math.erf %50 : vector<8x128xf32>
    %cst_30 = arith.constant 1.000000e+00 : f32
    %52 = vector.broadcast %cst_30 : f32 to vector<8x128xf32>
    %53 = arith.addf %52, %51 : vector<8x128xf32>
    %54 = arith.mulf %48, %53 : vector<8x128xf32>
    %c4 = arith.constant 4 : index
    %c0_31 = arith.constant 0 : index
    %c0_32 = arith.constant 0 : index
    %55 = vector.load %arg3[%c4, %c0_31, %c0_32] : memref<8x128x128xf32, #tpu.memory_space<vmem>>, vector<1x128x128xf32>
    %56 = vector.shape_cast %55 : vector<1x128x128xf32> to vector<128x128xf32>
    %cst_33 = arith.constant dense<0.000000e+00> : vector<8x128xf32>
    %57 = tpu.matmul %54, %56, %cst_33 {dimension_numbers = #tpu.dot_dimension_numbers<[1], [0], [0], [1], [0, 0, 1, 1], [], []>} : vector<8x128xf32>, vector<128x128xf32>, vector<8x128xf32> -> vector<8x128xf32>
    %cst_34 = arith.constant 5.000000e-01 : f32
    %58 = vector.broadcast %cst_34 : f32 to vector<8x128xf32>
    %59 = arith.mulf %58, %57 : vector<8x128xf32>
    %cst_35 = arith.constant 0.707106769 : f32
    %60 = vector.broadcast %cst_35 : f32 to vector<8x128xf32>
    %61 = arith.mulf %57, %60 : vector<8x128xf32>
    %62 = math.erf %61 : vector<8x128xf32>
    %cst_36 = arith.constant 1.000000e+00 : f32
    %63 = vector.broadcast %cst_36 : f32 to vector<8x128xf32>
    %64 = arith.addf %63, %62 : vector<8x128xf32>
    %65 = arith.mulf %59, %64 : vector<8x128xf32>
    %c5 = arith.constant 5 : index
    %c0_37 = arith.constant 0 : index
    %c0_38 = arith.constant 0 : index
    %66 = vector.load %arg3[%c5, %c0_37, %c0_38] : memref<8x128x128xf32, #tpu.memory_space<vmem>>, vector<1x128x128xf32>
    %67 = vector.shape_cast %66 : vector<1x128x128xf32> to vector<128x128xf32>
    %cst_39 = arith.constant dense<0.000000e+00> : vector<8x128xf32>
    %68 = tpu.matmul %65, %67, %cst_39 {dimension_numbers = #tpu.dot_dimension_numbers<[1], [0], [0], [1], [0, 0, 1, 1], [], []>} : vector<8x128xf32>, vector<128x128xf32>, vector<8x128xf32> -> vector<8x128xf32>
    %cst_40 = arith.constant 5.000000e-01 : f32
    %69 = vector.broadcast %cst_40 : f32 to vector<8x128xf32>
    %70 = arith.mulf %69, %68 : vector<8x128xf32>
    %cst_41 = arith.constant 0.707106769 : f32
    %71 = vector.broadcast %cst_41 : f32 to vector<8x128xf32>
    %72 = arith.mulf %68, %71 : vector<8x128xf32>
    %73 = math.erf %72 : vector<8x128xf32>
    %cst_42 = arith.constant 1.000000e+00 : f32
    %74 = vector.broadcast %cst_42 : f32 to vector<8x128xf32>
    %75 = arith.addf %74, %73 : vector<8x128xf32>
    %76 = arith.mulf %70, %75 : vector<8x128xf32>
    %c6 = arith.constant 6 : index
    %c0_43 = arith.constant 0 : index
    %c0_44 = arith.constant 0 : index
    %77 = vector.load %arg3[%c6, %c0_43, %c0_44] : memref<8x128x128xf32, #tpu.memory_space<vmem>>, vector<1x128x128xf32>
    %78 = vector.shape_cast %77 : vector<1x128x128xf32> to vector<128x128xf32>
    %cst_45 = arith.constant dense<0.000000e+00> : vector<8x128xf32>
    %79 = tpu.matmul %76, %78, %cst_45 {dimension_numbers = #tpu.dot_dimension_numbers<[1], [0], [0], [1], [0, 0, 1, 1], [], []>} : vector<8x128xf32>, vector<128x128xf32>, vector<8x128xf32> -> vector<8x128xf32>
    %cst_46 = arith.constant 5.000000e-01 : f32
    %80 = vector.broadcast %cst_46 : f32 to vector<8x128xf32>
    %81 = arith.mulf %80, %79 : vector<8x128xf32>
    %cst_47 = arith.constant 0.707106769 : f32
    %82 = vector.broadcast %cst_47 : f32 to vector<8x128xf32>
    %83 = arith.mulf %79, %82 : vector<8x128xf32>
    %84 = math.erf %83 : vector<8x128xf32>
    %cst_48 = arith.constant 1.000000e+00 : f32
    %85 = vector.broadcast %cst_48 : f32 to vector<8x128xf32>
    %86 = arith.addf %85, %84 : vector<8x128xf32>
    %87 = arith.mulf %81, %86 : vector<8x128xf32>
    %c7 = arith.constant 7 : index
    %c0_49 = arith.constant 0 : index
    %c0_50 = arith.constant 0 : index
    %88 = vector.load %arg3[%c7, %c0_49, %c0_50] : memref<8x128x128xf32, #tpu.memory_space<vmem>>, vector<1x128x128xf32>
    %89 = vector.shape_cast %88 : vector<1x128x128xf32> to vector<128x128xf32>
    %cst_51 = arith.constant dense<0.000000e+00> : vector<8x128xf32>
    %90 = tpu.matmul %87, %89, %cst_51 {dimension_numbers = #tpu.dot_dimension_numbers<[1], [0], [0], [1], [0, 0, 1, 1], [], []>} : vector<8x128xf32>, vector<128x128xf32>, vector<8x128xf32> -> vector<8x128xf32>
    %cst_52 = arith.constant 5.000000e-01 : f32
    %91 = vector.broadcast %cst_52 : f32 to vector<8x128xf32>
    %92 = arith.mulf %91, %90 : vector<8x128xf32>
    %cst_53 = arith.constant 0.707106769 : f32
    %93 = vector.broadcast %cst_53 : f32 to vector<8x128xf32>
    %94 = arith.mulf %90, %93 : vector<8x128xf32>
    %95 = math.erf %94 : vector<8x128xf32>
    %cst_54 = arith.constant 1.000000e+00 : f32
    %96 = vector.broadcast %cst_54 : f32 to vector<8x128xf32>
    %97 = arith.addf %96, %95 : vector<8x128xf32>
    %98 = arith.mulf %92, %97 : vector<8x128xf32>
    %c0_55 = arith.constant 0 : index
    %c0_56 = arith.constant 0 : index
    %99 = vector.load %arg4[%c0_55, %c0_56] : memref<128x128xf32, #tpu.memory_space<vmem>>, vector<128x128xf32>
    %cst_57 = arith.constant dense<0.000000e+00> : vector<8x128xf32>
    %100 = tpu.matmul %98, %99, %cst_57 {dimension_numbers = #tpu.dot_dimension_numbers<[1], [0], [0], [1], [0, 0, 1, 1], [], []>} : vector<8x128xf32>, vector<128x128xf32>, vector<8x128xf32> -> vector<8x128xf32>
    %c0_58 = arith.constant 0 : index
    %c0_59 = arith.constant 0 : index
    %101 = vector.load %arg5[%c0_58, %c0_59] : memref<8x128xf32, #tpu.memory_space<vmem>>, vector<8x128xf32>
    tpu.vector_store %arg5[%c0_58, %c0_59], %100 {strides = array<i32>} : memref<8x128xf32, #tpu.memory_space<vmem>>, vector<8x128xf32>,
    return
  }
  func.func @transform_0(%arg0: i32) -> (i32, i32) {
    %c0_i32 = arith.constant 0 : i32
    %c0_i32_0 = arith.constant 0 : i32
    return %arg0, %c0_i32 : i32, i32
  }
  func.func @transform_1(%arg0: i32) -> (i32, i32) {
    %c0_i32 = arith.constant 0 : i32
    %c0_i32_0 = arith.constant 0 : i32
    %c0_i32_1 = arith.constant 0 : i32
    return %c0_i32, %c0_i32_0 : i32, i32
  }
  func.func @transform_2(%arg0: i32) -> (i32, i32, i32) {
    %c0_i32 = arith.constant 0 : i32
    %c0_i32_0 = arith.constant 0 : i32
    %c0_i32_1 = arith.constant 0 : i32
    %c0_i32_2 = arith.constant 0 : i32
    return %c0_i32, %c0_i32_0, %c0_i32_1 : i32, i32, i32
  }
  func.func @transform_3(%arg0: i32) -> (i32, i32) {
    %c0_i32 = arith.constant 0 : i32
    %c0_i32_0 = arith.constant 0 : i32
    %c0_i32_1 = arith.constant 0 : i32
    return %c0_i32, %c0_i32_0 : i32, i32
  }
  func.func @transform_4(%arg0: i32) -> (i32, i32) {
    %c0_i32 = arith.constant 0 : i32
    %c0_i32_0 = arith.constant 0 : i32
    return %arg0, %c0_i32 : i32, i32
  }
}

</mosaic_0001>

<llo_original>
// kernel: dnn_forward.1
$region0: #{dnn_forward.1}
  #allocation0 [shape = 'u32[]', space=smem, size = 0x4, offset = 0x4, fixed_abs, tag = 'smem constant byte address 0x4 - core index']
  #allocation1 [shape = 'u32[144,128]{1,0:T(1,128)}', space=vmem, size = 0x12000, scoped, tag = 'internal scratch']
  %s0 = inlined_call_operand.vmem [shape: f32[2,3072], index: 0, kind: input, shape index: {}]
  %s1 = inlined_call_operand.vmem [shape: f32[3072,128], index: 1, kind: input, shape index: {}]
  %s2 = inlined_call_operand.vmem [shape: f32[8,128,128], index: 2, kind: input, shape index: {}]
  %s3 = inlined_call_operand.vmem [shape: f32[128,128], index: 3, kind: input, shape index: {}]
  %s4 = inlined_call_operand.hbm [shape: f32[2,128], index: 4, kind: output, shape index: {}]
  %s5 = sld [smem:[#allocation0]]
  $region26: #{dnn_forward.1} parent=0
    _
  %s7 = ssub.s32 1, %s5
  %s8 = scalar_select 0, %s7, %s5
  $region1: #{dnn_forward.1} parent=0
    #allocation2 [shape = 'u8[4096]{0}', space=vmem, size = 0x1000, scoped, tag = 'output window, operand 0, single buffered']
    #allocation3 [shape = 's32[1]{0}', space=sflag, size = 0x4, scoped, tag = 'scoped memory for dnn_forward.1']
    %9 = vsyncpa [#allocation3], 0
    // Predicated region
    $region2: #{dnn_forward.1} parent=1 // pred_check
      _
    $region3: #{dnn_forward.1} parent=1 // pred_check_branch
      %11 = sbr.rel (0) target = $region5
    $region4: #{dnn_forward.1} parent=1 // pred_region
      _
    $region5: #{dnn_forward.1} parent=1 // pred_fallthru
      _
    // Predicated region
    $region6: #{dnn_forward.1} parent=1 // pred_check
      _
    $region7: #{dnn_forward.1} parent=1 // pred_check_branch
      %13 = sbr.rel (0) target = $region9
    $region8: #{dnn_forward.1} parent=1 // pred_region
      _
    $region9: #{dnn_forward.1} parent=1 // pred_fallthru
      _
    // Predicated region
    $region10: #{dnn_forward.1} parent=1 // pred_check
      _
    $region11: #{dnn_forward.1} parent=1 // pred_check_branch
      %15 = sbr.rel (0) target = $region13
    $region12: #{dnn_forward.1} parent=1 // pred_region
      _
    $region13: #{dnn_forward.1} parent=1 // pred_fallthru
      _
    // Predicated region
    $region14: #{dnn_forward.1} parent=1 // pred_check
      _
    $region15: #{dnn_forward.1} parent=1 // pred_check_branch
      %17 = sbr.rel (0) target = $region17
    $region16: #{dnn_forward.1} parent=1 // pred_region
      _
    $region17: #{dnn_forward.1} parent=1 // pred_fallthru
      _
    %v18 = vld [vmem:[%s0] sm:$0xff]
    %v19 = vld [vmem:[%s0 + $0x8] sm:$0xff]
    %v20 = vld [vmem:[%s0 + $0x10] sm:$0xff]
    %v21 = vld [vmem:[%s0 + $0x18] sm:$0xff]
    %v22 = vld [vmem:[%s0 + $0x20] sm:$0xff]
    %v23 = vld [vmem:[%s0 + $0x28] sm:$0xff]
    %v24 = vld [vmem:[%s0 + $0x30] sm:$0xff]
    %v25 = vld [vmem:[%s0 + $0x38] sm:$0xff]
    %v26 = vld [vmem:[%s0 + $0x40] sm:$0xff]
    %v27 = vld [vmem:[%s0 + $0x48] sm:$0xff]
    %v28 = vld [vmem:[%s0 + $0x50] sm:$0xff]
    %v29 = vld [vmem:[%s0 + $0x58] sm:$0xff]
    %v30 = vld [vmem:[%s0 + $0x60] sm:$0xff]
    %v31 = vld [vmem:[%s0 + $0x68] sm:$0xff]
    %v32 = vld [vmem:[%s0 + $0x70] sm:$0xff]
    %v33 = vld [vmem:[%s0 + $0x78] sm:$0xff]
    %v34 = vld [vmem:[%s0 + $0x80] sm:$0xff]
    %v35 = vld [vmem:[%s0 + $0x88] sm:$0xff]
    %v36 = vld [vmem:[%s0 + $0x90] sm:$0xff]
    %v37 = vld [vmem:[%s0 + $0x98] sm:$0xff]
    %v38 = vld [vmem:[%s0 + $0xa0] sm:$0xff]
    %v39 = vld [vmem:[%s0 + $0xa8] sm:$0xff]
    %v40 = vld [vmem:[%s0 + $0xb0] sm:$0xff]
    %v41 = vld [vmem:[%s0 + $0xb8] sm:$0xff]
    %v42 = vld [vmem:[%s1] sm:$0xff]
    %v43 = vld [vmem:[%s1 + $0x8] sm:$0xff]
    %v44 = vld [vmem:[%s1 + $0x10] sm:$0xff]
    %v45 = vld [vmem:[%s1 + $0x18] sm:$0xff]
    %v46 = vld [vmem:[%s1 + $0x20] sm:$0xff]
    %v47 = vld [vmem:[%s1 + $0x28] sm:$0xff]
    %v48 = vld [vmem:[%s1 + $0x30] sm:$0xff]
    %v49 = vld [vmem:[%s1 + $0x38] sm:$0xff]
    %v50 = vld [vmem:[%s1 + $0x40] sm:$0xff]
    %v51 = vld [vmem:[%s1 + $0x48] sm:$0xff]
    %v52 = vld [vmem:[%s1 + $0x50] sm:$0xff]
    %v53 = vld [vmem:[%s1 + $0x58] sm:$0xff]
    %v54 = vld [vmem:[%s1 + $0x60] sm:$0xff]
    %v55 = vld [vmem:[%s1 + $0x68] sm:$0xff]
    %v56 = vld [vmem:[%s1 + $0x70] sm:$0xff]
    %v57 = vld [vmem:[%s1 + $0x78] sm:$0xff]
    %v58 = vld [vmem:[%s1 + $0x80] sm:$0xff]
    %v59 = vld [vmem:[%s1 + $0x88] sm:$0xff]
    %v60 = vld [vmem:[%s1 + $0x90] sm:$0xff]
    %v61 = vld [vmem:[%s1 + $0x98] sm:$0xff]
    %v62 = vld [vmem:[%s1 + $0xa0] sm:$0xff]
    %v63 = vld [vmem:[%s1 + $0xa8] sm:$0xff]
    %v64 = vld [vmem:[%s1 + $0xb0] sm:$0xff]
    %v65 = vld [vmem:[%s1 + $0xb8] sm:$0xff]
    %v66 = vld [vmem:[%s1 + $0xc0] sm:$0xff]
    %v67 = vld [vmem:[%s1 + $0xc8] sm:$0xff]
    %v68 = vld [vmem:[%s1 + $0xd0] sm:$0xff]
    %v69 = vld [vmem:[%s1 + $0xd8] sm:$0xff]
    %v70 = vld [vmem:[%s1 + $0xe0] sm:$0xff]
    %v71 = vld [vmem:[%s1 + $0xe8] sm:$0xff]
    %v72 = vld [vmem:[%s1 + $0xf0] sm:$0xff]
    %v73 = vld [vmem:[%s1 + $0xf8] sm:$0xff]
    %v74 = vld [vmem:[%s1 + $0x100] sm:$0xff]
    %v75 = vld [vmem:[%s1 + $0x108] sm:$0xff]
    %v76 = vld [vmem:[%s1 + $0x110] sm:$0xff]
    %v77 = vld [vmem:[%s1 + $0x118] sm:$0xff]
    %v78 = vld [vmem:[%s1 + $0x120] sm:$0xff]
    %v79 = vld [vmem:[%s1 + $0x128] sm:$0xff]
    %v80 = vld [vmem:[%s1 + $0x130] sm:$0xff]
    %v81 = vld [vmem:[%s1 + $0x138] sm:$0xff]
    %v82 = vld [vmem:[%s1 + $0x140] sm:$0xff]
    %v83 = vld [vmem:[%s1 + $0x148] sm:$0xff]
    %v84 = vld [vmem:[%s1 + $0x150] sm:$0xff]
    %v85 = vld [vmem:[%s1 + $0x158] sm:$0xff]
    %v86 = vld [vmem:[%s1 + $0x160] sm:$0xff]
    %v87 = vld [vmem:[%s1 + $0x168] sm:$0xff]
    %v88 = vld [vmem:[%s1 + $0x170] sm:$0xff]
    %v89 = vld [vmem:[%s1 + $0x178] sm:$0xff]
    %v90 = vld [vmem:[%s1 + $0x180] sm:$0xff]
    %v91 = vld [vmem:[%s1 + $0x188] sm:$0xff]
    %v92 = vld [vmem:[%s1 + $0x190] sm:$0xff]
    %v93 = vld [vmem:[%s1 + $0x198] sm:$0xff]
    %v94 = vld [vmem:[%s1 + $0x1a0] sm:$0xff]
    %v95 = vld [vmem:[%s1 + $0x1a8] sm:$0xff]
    %v96 = vld [vmem:[%s1 + $0x1b0] sm:$0xff]
    %v97 = vld [vmem:[%s1 + $0x1b8] sm:$0xff]
    %v98 = vld [vmem:[%s1 + $0x1c0] sm:$0xff]
    %v99 = vld [vmem:[%s1 + $0x1c8] sm:$0xff]
    %v100 = vld [vmem:[%s1 + $0x1d0] sm:$0xff]
    %v101 = vld [vmem:[%s1 + $0x1d8] sm:$0xff]
    %v102 = vld [vmem:[%s1 + $0x1e0] sm:$0xff]
    %v103 = vld [vmem:[%s1 + $0x1e8] sm:$0xff]
    %v104 = vld [vmem:[%s1 + $0x1f0] sm:$0xff]
    %v105 = vld [vmem:[%s1 + $0x1f8] sm:$0xff]
    %v106 = vld [vmem:[%s1 + $0x200] sm:$0xff]
    %v107 = vld [vmem:[%s1 + $0x208] sm:$0xff]
    %v108 = vld [vmem:[%s1 + $0x210] sm:$0xff]
    %v109 = vld [vmem:[%s1 + $0x218] sm:$0xff]
    %v110 = vld [vmem:[%s1 + $0x220] sm:$0xff]
    %v111 = vld [vmem:[%s1 + $0x228] sm:$0xff]
    %v112 = vld [vmem:[%s1 + $0x230] sm:$0xff]
    %v113 = vld [vmem:[%s1 + $0x238] sm:$0xff]
    %v114 = vld [vmem:[%s1 + $0x240] sm:$0xff]
    %v115 = vld [vmem:[%s1 + $0x248] sm:$0xff]
    %v116 = vld [vmem:[%s1 + $0x250] sm:$0xff]
    %v117 = vld [vmem:[%s1 + $0x258] sm:$0xff]
    %v118 = vld [vmem:[%s1 + $0x260] sm:$0xff]
    %v119 = vld [vmem:[%s1 + $0x268] sm:$0xff]
    %v120 = vld [vmem:[%s1 + $0x270] sm:$0xff]
    %v121 = vld [vmem:[%s1 + $0x278] sm:$0xff]
    %v122 = vld [vmem:[%s1 + $0x280] sm:$0xff]
    %v123 = vld [vmem:[%s1 + $0x288] sm:$0xff]
    %v124 = vld [vmem:[%s1 + $0x290] sm:$0xff]
    %v125 = vld [vmem:[%s1 + $0x298] sm:$0xff]
    %v126 = vld [vmem:[%s1 + $0x2a0] sm:$0xff]
    %v127 = vld [vmem:[%s1 + $0x2a8] sm:$0xff]
    %v128 = vld [vmem:[%s1 + $0x2b0] sm:$0xff]
    %v129 = vld [vmem:[%s1 + $0x2b8] sm:$0xff]
    %v130 = vld [vmem:[%s1 + $0x2c0] sm:$0xff]
    %v131 = vld [vmem:[%s1 + $0x2c8] sm:$0xff]
    %v132 = vld [vmem:[%s1 + $0x2d0] sm:$0xff]
    %v133 = vld [vmem:[%s1 + $0x2d8] sm:$0xff]
    %v134 = vld [vmem:[%s1 + $0x2e0] sm:$0xff]
    %v135 = vld [vmem:[%s1 + $0x2e8] sm:$0xff]
    %v136 = vld [vmem:[%s1 + $0x2f0] sm:$0xff]
    %v137 = vld [vmem:[%s1 + $0x2f8] sm:$0xff]
    %v138 = vld [vmem:[%s1 + $0x300] sm:$0xff]
    %v139 = vld [vmem:[%s1 + $0x308] sm:$0xff]
    %v140 = vld [vmem:[%s1 + $0x310] sm:$0xff]
    %v141 = vld [vmem:[%s1 + $0x318] sm:$0xff]
    %v142 = vld [vmem:[%s1 + $0x320] sm:$0xff]
    %v143 = vld [vmem:[%s1 + $0x328] sm:$0xff]
    %v144 = vld [vmem:[%s1 + $0x330] sm:$0xff]
    %v145 = vld [vmem:[%s1 + $0x338] sm:$0xff]
    %v146 = vld [vmem:[%s1 + $0x340] sm:$0xff]
    %v147 = vld [vmem:[%s1 + $0x348] sm:$0xff]
    %v148 = vld [vmem:[%s1 + $0x350] sm:$0xff]
    %v149 = vld [vmem:[%s1 + $0x358] sm:$0xff]
    %v150 = vld [vmem:[%s1 + $0x360] sm:$0xff]
    %v151 = vld [vmem:[%s1 + $0x368] sm:$0xff]
    %v152 = vld [vmem:[%s1 + $0x370] sm:$0xff]
    %v153 = vld [vmem:[%s1 + $0x378] sm:$0xff]
    %v154 = vld [vmem:[%s1 + $0x380] sm:$0xff]
    %v155 = vld [vmem:[%s1 + $0x388] sm:$0xff]
    %v156 = vld [vmem:[%s1 + $0x390] sm:$0xff]
    %v157 = vld [vmem:[%s1 + $0x398] sm:$0xff]
    %v158 = vld [vmem:[%s1 + $0x3a0] sm:$0xff]
    %v159 = vld [vmem:[%s1 + $0x3a8] sm:$0xff]
    %v160 = vld [vmem:[%s1 + $0x3b0] sm:$0xff]
    %v161 = vld [vmem:[%s1 + $0x3b8] sm:$0xff]
    %v162 = vld [vmem:[%s1 + $0x3c0] sm:$0xff]
    %v163 = vld [vmem:[%s1 + $0x3c8] sm:$0xff]
    %v164 = vld [vmem:[%s1 + $0x3d0] sm:$0xff]
    %v165 = vld [vmem:[%s1 + $0x3d8] sm:$0xff]
    %v166 = vld [vmem:[%s1 + $0x3e0] sm:$0xff]
    %v167 = vld [vmem:[%s1 + $0x3e8] sm:$0xff]
    %v168 = vld [vmem:[%s1 + $0x3f0] sm:$0xff]
    %v169 = vld [vmem:[%s1 + $0x3f8] sm:$0xff]
    %v170 = vld [vmem:[%s1 + $0x400] sm:$0xff]
    %v171 = vld [vmem:[%s1 + $0x408] sm:$0xff]
    %v172 = vld [vmem:[%s1 + $0x410] sm:$0xff]
    %v173 = vld [vmem:[%s1 + $0x418] sm:$0xff]
    %v174 = vld [vmem:[%s1 + $0x420] sm:$0xff]
    %v175 = vld [vmem:[%s1 + $0x428] sm:$0xff]
    %v176 = vld [vmem:[%s1 + $0x430] sm:$0xff]
    %v177 = vld [vmem:[%s1 + $0x438] sm:$0xff]
    %v178 = vld [vmem:[%s1 + $0x440] sm:$0xff]
    %v179 = vld [vmem:[%s1 + $0x448] sm:$0xff]
    %v180 = vld [vmem:[%s1 + $0x450] sm:$0xff]
    %v181 = vld [vmem:[%s1 + $0x458] sm:$0xff]
    %v182 = vld [vmem:[%s1 + $0x460] sm:$0xff]
    %v183 = vld [vmem:[%s1 + $0x468] sm:$0xff]
    %v184 = vld [vmem:[%s1 + $0x470] sm:$0xff]
    %v185 = vld [vmem:[%s1 + $0x478] sm:$0xff]
    %v186 = vld [vmem:[%s1 + $0x480] sm:$0xff]
    %v187 = vld [vmem:[%s1 + $0x488] sm:$0xff]
    %v188 = vld [vmem:[%s1 + $0x490] sm:$0xff]
    %v189 = vld [vmem:[%s1 + $0x498] sm:$0xff]
    %v190 = vld [vmem:[%s1 + $0x4a0] sm:$0xff]
    %v191 = vld [vmem:[%s1 + $0x4a8] sm:$0xff]
    %v192 = vld [vmem:[%s1 + $0x4b0] sm:$0xff]
    %v193 = vld [vmem:[%s1 + $0x4b8] sm:$0xff]
    %v194 = vld [vmem:[%s1 + $0x4c0] sm:$0xff]
    %v195 = vld [vmem:[%s1 + $0x4c8] sm:$0xff]
    %v196 = vld [vmem:[%s1 + $0x4d0] sm:$0xff]
    %v197 = vld [vmem:[%s1 + $0x4d8] sm:$0xff]
    %v198 = vld [vmem:[%s1 + $0x4e0] sm:$0xff]
    %v199 = vld [vmem:[%s1 + $0x4e8] sm:$0xff]
    %v200 = vld [vmem:[%s1 + $0x4f0] sm:$0xff]
    %v201 = vld [vmem:[%s1 + $0x4f8] sm:$0xff]
    %v202 = vld [vmem:[%s1 + $0x500] sm:$0xff]
    %v203 = vld [vmem:[%s1 + $0x508] sm:$0xff]
    %v204 = vld [vmem:[%s1 + $0x510] sm:$0xff]
    %v205 = vld [vmem:[%s1 + $0x518] sm:$0xff]
    %v206 = vld [vmem:[%s1 + $0x520] sm:$0xff]
    %v207 = vld [vmem:[%s1 + $0x528] sm:$0xff]
    %v208 = vld [vmem:[%s1 + $0x530] sm:$0xff]
    %v209 = vld [vmem:[%s1 + $0x538] sm:$0xff]
    %v210 = vld [vmem:[%s1 + $0x540] sm:$0xff]
    %v211 = vld [vmem:[%s1 + $0x548] sm:$0xff]
    %v212 = vld [vmem:[%s1 + $0x550] sm:$0xff]
    %v213 = vld [vmem:[%s1 + $0x558] sm:$0xff]
    %v214 = vld [vmem:[%s1 + $0x560] sm:$0xff]
    %v215 = vld [vmem:[%s1 + $0x568] sm:$0xff]
    %v216 = vld [vmem:[%s1 + $0x570] sm:$0xff]
    %v217 = vld [vmem:[%s1 + $0x578] sm:$0xff]
    %v218 = vld [vmem:[%s1 + $0x580] sm:$0xff]
    %v219 = vld [vmem:[%s1 + $0x588] sm:$0xff]
    %v220 = vld [vmem:[%s1 + $0x590] sm:$0xff]
    %v221 = vld [vmem:[%s1 + $0x598] sm:$0xff]
    %v222 = vld [vmem:[%s1 + $0x5a0] sm:$0xff]
    %v223 = vld [vmem:[%s1 + $0x5a8] sm:$0xff]
    %v224 = vld [vmem:[%s1 + $0x5b0] sm:$0xff]
    %v225 = vld [vmem:[%s1 + $0x5b8] sm:$0xff]
    %v226 = vld [vmem:[%s1 + $0x5c0] sm:$0xff]
    %v227 = vld [vmem:[%s1 + $0x5c8] sm:$0xff]
    %v228 = vld [vmem:[%s1 + $0x5d0] sm:$0xff]
    %v229 = vld [vmem:[%s1 + $0x5d8] sm:$0xff]
    %v230 = vld [vmem:[%s1 + $0x5e0] sm:$0xff]
    %v231 = vld [vmem:[%s1 + $0x5e8] sm:$0xff]
    %v232 = vld [vmem:[%s1 + $0x5f0] sm:$0xff]
    %v233 = vld [vmem:[%s1 + $0x5f8] sm:$0xff]
    %v234 = vld [vmem:[%s1 + $0x600] sm:$0xff]
    %v235 = vld [vmem:[%s1 + $0x608] sm:$0xff]
    %v236 = vld [vmem:[%s1 + $0x610] sm:$0xff]
    %v237 = vld [vmem:[%s1 + $0x618] sm:$0xff]
    %v238 = vld [vmem:[%s1 + $0x620] sm:$0xff]
    %v239 = vld [vmem:[%s1 + $0x628] sm:$0xff]
    %v240 = vld [vmem:[%s1 + $0x630] sm:$0xff]
    %v241 = vld [vmem:[%s1 + $0x638] sm:$0xff]
    %v242 = vld [vmem:[%s1 + $0x640] sm:$0xff]
    %v243 = vld [vmem:[%s1 + $0x648] sm:$0xff]
    %v244 = vld [vmem:[%s1 + $0x650] sm:$0xff]
    %v245 = vld [vmem:[%s1 + $0x658] sm:$0xff]
    %v246 = vld [vmem:[%s1 + $0x660] sm:$0xff]
    %v247 = vld [vmem:[%s1 + $0x668] sm:$0xff]
    %v248 = vld [vmem:[%s1 + $0x670] sm:$0xff]
    %v249 = vld [vmem:[%s1 + $0x678] sm:$0xff]
    %v250 = vld [vmem:[%s1 + $0x680] sm:$0xff]
    %v251 = vld [vmem:[%s1 + $0x688] sm:$0xff]
    %v252 = vld [vmem:[%s1 + $0x690] sm:$0xff]
    %v253 = vld [vmem:[%s1 + $0x698] sm:$0xff]
    %v254 = vld [vmem:[%s1 + $0x6a0] sm:$0xff]
    %v255 = vld [vmem:[%s1 + $0x6a8] sm:$0xff]
    %v256 = vld [vmem:[%s1 + $0x6b0] sm:$0xff]
    %v257 = vld [vmem:[%s1 + $0x6b8] sm:$0xff]
    %v258 = vld [vmem:[%s1 + $0x6c0] sm:$0xff]
    %v259 = vld [vmem:[%s1 + $0x6c8] sm:$0xff]
    %v260 = vld [vmem:[%s1 + $0x6d0] sm:$0xff]
    %v261 = vld [vmem:[%s1 + $0x6d8] sm:$0xff]
    %v262 = vld [vmem:[%s1 + $0x6e0] sm:$0xff]
    %v263 = vld [vmem:[%s1 + $0x6e8] sm:$0xff]
    %v264 = vld [vmem:[%s1 + $0x6f0] sm:$0xff]
    %v265 = vld [vmem:[%s1 + $0x6f8] sm:$0xff]
    %v266 = vld [vmem:[%s1 + $0x700] sm:$0xff]
    %v267 = vld [vmem:[%s1 + $0x708] sm:$0xff]
    %v268 = vld [vmem:[%s1 + $0x710] sm:$0xff]
    %v269 = vld [vmem:[%s1 + $0x718] sm:$0xff]
    %v270 = vld [vmem:[%s1 + $0x720] sm:$0xff]
    %v271 = vld [vmem:[%s1 + $0x728] sm:$0xff]
    %v272 = vld [vmem:[%s1 + $0x730] sm:$0xff]
    %v273 = vld [vmem:[%s1 + $0x738] sm:$0xff]
    %v274 = vld [vmem:[%s1 + $0x740] sm:$0xff]
    %v275 = vld [vmem:[%s1 + $0x748] sm:$0xff]
    %v276 = vld [vmem:[%s1 + $0x750] sm:$0xff]
    %v277 = vld [vmem:[%s1 + $0x758] sm:$0xff]
    %v278 = vld [vmem:[%s1 + $0x760] sm:$0xff]
    %v279 = vld [vmem:[%s1 + $0x768] sm:$0xff]
    %v280 = vld [vmem:[%s1 + $0x770] sm:$0xff]
    %v281 = vld [vmem:[%s1 + $0x778] sm:$0xff]
    %v282 = vld [vmem:[%s1 + $0x780] sm:$0xff]
    %v283 = vld [vmem:[%s1 + $0x788] sm:$0xff]
    %v284 = vld [vmem:[%s1 + $0x790] sm:$0xff]
    %v285 = vld [vmem:[%s1 + $0x798] sm:$0xff]
    %v286 = vld [vmem:[%s1 + $0x7a0] sm:$0xff]
    %v287 = vld [vmem:[%s1 + $0x7a8] sm:$0xff]
    %v288 = vld [vmem:[%s1 + $0x7b0] sm:$0xff]
    %v289 = vld [vmem:[%s1 + $0x7b8] sm:$0xff]
    %v290 = vld [vmem:[%s1 + $0x7c0] sm:$0xff]
    %v291 = vld [vmem:[%s1 + $0x7c8] sm:$0xff]
    %v292 = vld [vmem:[%s1 + $0x7d0] sm:$0xff]
    %v293 = vld [vmem:[%s1 + $0x7d8] sm:$0xff]
    %v294 = vld [vmem:[%s1 + $0x7e0] sm:$0xff]
    %v295 = vld [vmem:[%s1 + $0x7e8] sm:$0xff]
    %v296 = vld [vmem:[%s1 + $0x7f0] sm:$0xff]
    %v297 = vld [vmem:[%s1 + $0x7f8] sm:$0xff]
    %v298 = vld [vmem:[%s1 + $0x800] sm:$0xff]
    %v299 = vld [vmem:[%s1 + $0x808] sm:$0xff]
    %v300 = vld [vmem:[%s1 + $0x810] sm:$0xff]
    %v301 = vld [vmem:[%s1 + $0x818] sm:$0xff]
    %v302 = vld [vmem:[%s1 + $0x820] sm:$0xff]
    %v303 = vld [vmem:[%s1 + $0x828] sm:$0xff]
    %v304 = vld [vmem:[%s1 + $0x830] sm:$0xff]
    %v305 = vld [vmem:[%s1 + $0x838] sm:$0xff]
    %v306 = vld [vmem:[%s1 + $0x840] sm:$0xff]
    %v307 = vld [vmem:[%s1 + $0x848] sm:$0xff]
    %v308 = vld [vmem:[%s1 + $0x850] sm:$0xff]
    %v309 = vld [vmem:[%s1 + $0x858] sm:$0xff]
    %v310 = vld [vmem:[%s1 + $0x860] sm:$0xff]
    %v311 = vld [vmem:[%s1 + $0x868] sm:$0xff]
    %v312 = vld [vmem:[%s1 + $0x870] sm:$0xff]
    %v313 = vld [vmem:[%s1 + $0x878] sm:$0xff]
    %v314 = vld [vmem:[%s1 + $0x880] sm:$0xff]
    %v315 = vld [vmem:[%s1 + $0x888] sm:$0xff]
    %v316 = vld [vmem:[%s1 + $0x890] sm:$0xff]
    %v317 = vld [vmem:[%s1 + $0x898] sm:$0xff]
    %v318 = vld [vmem:[%s1 + $0x8a0] sm:$0xff]
    %v319 = vld [vmem:[%s1 + $0x8a8] sm:$0xff]
    %v320 = vld [vmem:[%s1 + $0x8b0] sm:$0xff]
    %v321 = vld [vmem:[%s1 + $0x8b8] sm:$0xff]
    %v322 = vld [vmem:[%s1 + $0x8c0] sm:$0xff]
    %v323 = vld [vmem:[%s1 + $0x8c8] sm:$0xff]
    %v324 = vld [vmem:[%s1 + $0x8d0] sm:$0xff]
    %v325 = vld [vmem:[%s1 + $0x8d8] sm:$0xff]
    %v326 = vld [vmem:[%s1 + $0x8e0] sm:$0xff]
    %v327 = vld [vmem:[%s1 + $0x8e8] sm:$0xff]
    %v328 = vld [vmem:[%s1 + $0x8f0] sm:$0xff]
    %v329 = vld [vmem:[%s1 + $0x8f8] sm:$0xff]
    %v330 = vld [vmem:[%s1 + $0x900] sm:$0xff]
    %v331 = vld [vmem:[%s1 + $0x908] sm:$0xff]
    %v332 = vld [vmem:[%s1 + $0x910] sm:$0xff]
    %v333 = vld [vmem:[%s1 + $0x918] sm:$0xff]
    %v334 = vld [vmem:[%s1 + $0x920] sm:$0xff]
    %v335 = vld [vmem:[%s1 + $0x928] sm:$0xff]
    %v336 = vld [vmem:[%s1 + $0x930] sm:$0xff]
    %v337 = vld [vmem:[%s1 + $0x938] sm:$0xff]
    %v338 = vld [vmem:[%s1 + $0x940] sm:$0xff]
    %v339 = vld [vmem:[%s1 + $0x948] sm:$0xff]
    %v340 = vld [vmem:[%s1 + $0x950] sm:$0xff]
    %v341 = vld [vmem:[%s1 + $0x958] sm:$0xff]
    %v342 = vld [vmem:[%s1 + $0x960] sm:$0xff]
    %v343 = vld [vmem:[%s1 + $0x968] sm:$0xff]
    %v344 = vld [vmem:[%s1 + $0x970] sm:$0xff]
    %v345 = vld [vmem:[%s1 + $0x978] sm:$0xff]
    %v346 = vld [vmem:[%s1 + $0x980] sm:$0xff]
    %v347 = vld [vmem:[%s1 + $0x988] sm:$0xff]
    %v348 = vld [vmem:[%s1 + $0x990] sm:$0xff]
    %v349 = vld [vmem:[%s1 + $0x998] sm:$0xff]
    %v350 = vld [vmem:[%s1 + $0x9a0] sm:$0xff]
    %v351 = vld [vmem:[%s1 + $0x9a8] sm:$0xff]
    %v352 = vld [vmem:[%s1 + $0x9b0] sm:$0xff]
    %v353 = vld [vmem:[%s1 + $0x9b8] sm:$0xff]
    %v354 = vld [vmem:[%s1 + $0x9c0] sm:$0xff]
    %v355 = vld [vmem:[%s1 + $0x9c8] sm:$0xff]
    %v356 = vld [vmem:[%s1 + $0x9d0] sm:$0xff]
    %v357 = vld [vmem:[%s1 + $0x9d8] sm:$0xff]
    %v358 = vld [vmem:[%s1 + $0x9e0] sm:$0xff]
    %v359 = vld [vmem:[%s1 + $0x9e8] sm:$0xff]
    %v360 = vld [vmem:[%s1 + $0x9f0] sm:$0xff]
    %v361 = vld [vmem:[%s1 + $0x9f8] sm:$0xff]
    %v362 = vld [vmem:[%s1 + $0xa00] sm:$0xff]
    %v363 = vld [vmem:[%s1 + $0xa08] sm:$0xff]
    %v364 = vld [vmem:[%s1 + $0xa10] sm:$0xff]
    %v365 = vld [vmem:[%s1 + $0xa18] sm:$0xff]
    %v366 = vld [vmem:[%s1 + $0xa20] sm:$0xff]
    %v367 = vld [vmem:[%s1 + $0xa28] sm:$0xff]
    %v368 = vld [vmem:[%s1 + $0xa30] sm:$0xff]
    %v369 = vld [vmem:[%s1 + $0xa38] sm:$0xff]
    %v370 = vld [vmem:[%s1 + $0xa40] sm:$0xff]
    %v371 = vld [vmem:[%s1 + $0xa48] sm:$0xff]
    %v372 = vld [vmem:[%s1 + $0xa50] sm:$0xff]
    %v373 = vld [vmem:[%s1 + $0xa58] sm:$0xff]
    %v374 = vld [vmem:[%s1 + $0xa60] sm:$0xff]
    %v375 = vld [vmem:[%s1 + $0xa68] sm:$0xff]
    %v376 = vld [vmem:[%s1 + $0xa70] sm:$0xff]
    %v377 = vld [vmem:[%s1 + $0xa78] sm:$0xff]
    %v378 = vld [vmem:[%s1 + $0xa80] sm:$0xff]
    %v379 = vld [vmem:[%s1 + $0xa88] sm:$0xff]
    %v380 = vld [vmem:[%s1 + $0xa90] sm:$0xff]
    %v381 = vld [vmem:[%s1 + $0xa98] sm:$0xff]
    %v382 = vld [vmem:[%s1 + $0xaa0] sm:$0xff]
    %v383 = vld [vmem:[%s1 + $0xaa8] sm:$0xff]
    %v384 = vld [vmem:[%s1 + $0xab0] sm:$0xff]
    %v385 = vld [vmem:[%s1 + $0xab8] sm:$0xff]
    %v386 = vld [vmem:[%s1 + $0xac0] sm:$0xff]
    %v387 = vld [vmem:[%s1 + $0xac8] sm:$0xff]
    %v388 = vld [vmem:[%s1 + $0xad0] sm:$0xff]
    %v389 = vld [vmem:[%s1 + $0xad8] sm:$0xff]
    %v390 = vld [vmem:[%s1 + $0xae0] sm:$0xff]
    %v391 = vld [vmem:[%s1 + $0xae8] sm:$0xff]
    %v392 = vld [vmem:[%s1 + $0xaf0] sm:$0xff]
    %v393 = vld [vmem:[%s1 + $0xaf8] sm:$0xff]
    %v394 = vld [vmem:[%s1 + $0xb00] sm:$0xff]
    %v395 = vld [vmem:[%s1 + $0xb08] sm:$0xff]
    %v396 = vld [vmem:[%s1 + $0xb10] sm:$0xff]
    %v397 = vld [vmem:[%s1 + $0xb18] sm:$0xff]
    %v398 = vld [vmem:[%s1 + $0xb20] sm:$0xff]
    %v399 = vld [vmem:[%s1 + $0xb28] sm:$0xff]
    %v400 = vld [vmem:[%s1 + $0xb30] sm:$0xff]
    %v401 = vld [vmem:[%s1 + $0xb38] sm:$0xff]
    %v402 = vld [vmem:[%s1 + $0xb40] sm:$0xff]
    %v403 = vld [vmem:[%s1 + $0xb48] sm:$0xff]
    %v404 = vld [vmem:[%s1 + $0xb50] sm:$0xff]
    %v405 = vld [vmem:[%s1 + $0xb58] sm:$0xff]
    %v406 = vld [vmem:[%s1 + $0xb60] sm:$0xff]
    %v407 = vld [vmem:[%s1 + $0xb68] sm:$0xff]
    %v408 = vld [vmem:[%s1 + $0xb70] sm:$0xff]
    %v409 = vld [vmem:[%s1 + $0xb78] sm:$0xff]
    %v410 = vld [vmem:[%s1 + $0xb80] sm:$0xff]
    %v411 = vld [vmem:[%s1 + $0xb88] sm:$0xff]
    %v412 = vld [vmem:[%s1 + $0xb90] sm:$0xff]
    %v413 = vld [vmem:[%s1 + $0xb98] sm:$0xff]
    %v414 = vld [vmem:[%s1 + $0xba0] sm:$0xff]
    %v415 = vld [vmem:[%s1 + $0xba8] sm:$0xff]
    %v416 = vld [vmem:[%s1 + $0xbb0] sm:$0xff]
    %v417 = vld [vmem:[%s1 + $0xbb8] sm:$0xff]
    %v418 = vld [vmem:[%s1 + $0xbc0] sm:$0xff]
    %v419 = vld [vmem:[%s1 + $0xbc8] sm:$0xff]
    %v420 = vld [vmem:[%s1 + $0xbd0] sm:$0xff]
    %v421 = vld [vmem:[%s1 + $0xbd8] sm:$0xff]
    %v422 = vld [vmem:[%s1 + $0xbe0] sm:$0xff]
    %v423 = vld [vmem:[%s1 + $0xbe8] sm:$0xff]
    %v424 = vld [vmem:[%s1 + $0xbf0] sm:$0xff]
    %v425 = vld [vmem:[%s1 + $0xbf8] sm:$0xff]
    %v450 = vcombine.low %v18, %v24
    %v451 = vcombine.high %v18, %v24
    %v452 = vcombine.low %v30, %v36
    %v453 = vcombine.high %v30, %v36
    %v455 = vunpack.c.l.s4 1983009808
    %v456 = vunpack.c.0.s8 %v455
    %v457 = vlaneseq
    %v458 = vshrl.u32 %v457, 7
    %v459 = vsub.s32 %v456, %v458
    %v460 = vrot.slane %v450, %v459
    %v462 = vunpack.c.l.s4 1983009808
    %v463 = vunpack.c.0.s8 %v462
    %v464 = vlaneseq
    %v465 = vshrl.u32 %v464, 7
    %v466 = vsub.s32 %v463, %v465
    %v467 = vrot.slane %v451, %v466
    %v469 = vunpack.c.l.s4 1983009808
    %v470 = vunpack.c.0.s8 %v469
    %v471 = vlaneseq
    %v472 = vshrl.u32 %v471, 7
    %v473 = vsub.s32 %v470, %v472
    %v474 = vrot.slane %v452, %v473
    %v476 = vunpack.c.l.s4 1983009808
    %v477 = vunpack.c.0.s8 %v476
    %v478 = vlaneseq
    %v479 = vshrl.u32 %v478, 7
    %v480 = vsub.s32 %v477, %v479
    %v481 = vrot.slane %v453, %v480
    %v482 = vcombine.low %v460, %v474
    %v483 = vcombine.high %v460, %v474
    %v484 = vcombine.low %v467, %v481
    %v485 = vcombine.high %v467, %v481
    %v486 = vcombine.low %v19, %v25
    %v487 = vcombine.high %v19, %v25
    %v488 = vcombine.low %v31, %v37
    %v489 = vcombine.high %v31, %v37
    %v491 = vunpack.c.l.s4 1983009808
    %v492 = vunpack.c.0.s8 %v491
    %v493 = vlaneseq
    %v494 = vshrl.u32 %v493, 7
    %v495 = vsub.s32 %v492, %v494
    %v496 = vrot.slane %v486, %v495
    %v498 = vunpack.c.l.s4 1983009808
    %v499 = vunpack.c.0.s8 %v498
    %v500 = vlaneseq
    %v501 = vshrl.u32 %v500, 7
    %v502 = vsub.s32 %v499, %v501
    %v503 = vrot.slane %v487, %v502
    %v505 = vunpack.c.l.s4 1983009808
    %v506 = vunpack.c.0.s8 %v505
    %v507 = vlaneseq
    %v508 = vshrl.u32 %v507, 7
    %v509 = vsub.s32 %v506, %v508
    %v510 = vrot.slane %v488, %v509
    %v512 = vunpack.c.l.s4 1983009808
    %v513 = vunpack.c.0.s8 %v512
    %v514 = vlaneseq
    %v515 = vshrl.u32 %v514, 7
    %v516 = vsub.s32 %v513, %v515
    %v517 = vrot.slane %v489, %v516
    %v518 = vcombine.low %v496, %v510
    %v519 = vcombine.high %v496, %v510
    %v520 = vcombine.low %v503, %v517
    %v521 = vcombine.high %v503, %v517
    %v522 = vcombine.low %v20, %v26
    %v523 = vcombine.high %v20, %v26
    %v524 = vcombine.low %v32, %v38
    %v525 = vcombine.high %v32, %v38
    %v527 = vunpack.c.l.s4 1983009808
    %v528 = vunpack.c.0.s8 %v527
    %v529 = vlaneseq
    %v530 = vshrl.u32 %v529, 7
    %v531 = vsub.s32 %v528, %v530
    %v532 = vrot.slane %v522, %v531
    %v534 = vunpack.c.l.s4 1983009808
    %v535 = vunpack.c.0.s8 %v534
    %v536 = vlaneseq
    %v537 = vshrl.u32 %v536, 7
    %v538 = vsub.s32 %v535, %v537
    %v539 = vrot.slane %v523, %v538
    %v541 = vunpack.c.l.s4 1983009808
    %v542 = vunpack.c.0.s8 %v541
    %v543 = vlaneseq
    %v544 = vshrl.u32 %v543, 7
    %v545 = vsub.s32 %v542, %v544
    %v546 = vrot.slane %v524, %v545
    %v548 = vunpack.c.l.s4 1983009808
    %v549 = vunpack.c.0.s8 %v548
    %v550 = vlaneseq
    %v551 = vshrl.u32 %v550, 7
    %v552 = vsub.s32 %v549, %v551
    %v553 = vrot.slane %v525, %v552
    %v554 = vcombine.low %v532, %v546
    %v555 = vcombine.high %v532, %v546
    %v556 = vcombine.low %v539, %v553
    %v557 = vcombine.high %v539, %v553
    %v558 = vcombine.low %v21, %v27
    %v559 = vcombine.high %v21, %v27
    %v560 = vcombine.low %v33, %v39
    %v561 = vcombine.high %v33, %v39
    %v563 = vunpack.c.l.s4 1983009808
    %v564 = vunpack.c.0.s8 %v563
    %v565 = vlaneseq
    %v566 = vshrl.u32 %v565, 7
    %v567 = vsub.s32 %v564, %v566
    %v568 = vrot.slane %v558, %v567
    %v570 = vunpack.c.l.s4 1983009808
    %v571 = vunpack.c.0.s8 %v570
    %v572 = vlaneseq
    %v573 = vshrl.u32 %v572, 7
    %v574 = vsub.s32 %v571, %v573
    %v575 = vrot.slane %v559, %v574
    %v577 = vunpack.c.l.s4 1983009808
    %v578 = vunpack.c.0.s8 %v577
    %v579 = vlaneseq
    %v580 = vshrl.u32 %v579, 7
    %v581 = vsub.s32 %v578, %v580
    %v582 = vrot.slane %v560, %v581
    %v584 = vunpack.c.l.s4 1983009808
    %v585 = vunpack.c.0.s8 %v584
    %v586 = vlaneseq
    %v587 = vshrl.u32 %v586, 7
    %v588 = vsub.s32 %v585, %v587
    %v589 = vrot.slane %v561, %v588
    %v590 = vcombine.low %v568, %v582
    %v591 = vcombine.high %v568, %v582
    %v592 = vcombine.low %v575, %v589
    %v593 = vcombine.high %v575, %v589
    %v594 = vcombine.low %v22, %v28
    %v595 = vcombine.high %v22, %v28
    %v596 = vcombine.low %v34, %v40
    %v597 = vcombine.high %v34, %v40
    %v599 = vunpack.c.l.s4 1983009808
    %v600 = vunpack.c.0.s8 %v599
    %v601 = vlaneseq
    %v602 = vshrl.u32 %v601, 7
    %v603 = vsub.s32 %v600, %v602
    %v604 = vrot.slane %v594, %v603
    %v606 = vunpack.c.l.s4 1983009808
    %v607 = vunpack.c.0.s8 %v606
    %v608 = vlaneseq
    %v609 = vshrl.u32 %v608, 7
    %v610 = vsub.s32 %v607, %v609
    %v611 = vrot.slane %v595, %v610
    %v613 = vunpack.c.l.s4 1983009808
    %v614 = vunpack.c.0.s8 %v613
    %v615 = vlaneseq
    %v616 = vshrl.u32 %v615, 7
    %v617 = vsub.s32 %v614, %v616
    %v618 = vrot.slane %v596, %v617
    %v620 = vunpack.c.l.s4 1983009808
    %v621 = vunpack.c.0.s8 %v620
    %v622 = vlaneseq
    %v623 = vshrl.u32 %v622, 7
    %v624 = vsub.s32 %v621, %v623
    %v625 = vrot.slane %v597, %v624
    %v626 = vcombine.low %v604, %v618
    %v627 = vcombine.high %v604, %v618
    %v628 = vcombine.low %v611, %v625
    %v629 = vcombine.high %v611, %v625
    %v630 = vcombine.low %v23, %v29
    %v631 = vcombine.high %v23, %v29
    %v632 = vcombine.low %v35, %v41
    %v633 = vcombine.high %v35, %v41
    %v635 = vunpack.c.l.s4 1983009808
    %v636 = vunpack.c.0.s8 %v635
    %v637 = vlaneseq
    %v638 = vshrl.u32 %v637, 7
    %v639 = vsub.s32 %v636, %v638
    %v640 = vrot.slane %v630, %v639
    %v642 = vunpack.c.l.s4 1983009808
    %v643 = vunpack.c.0.s8 %v642
    %v644 = vlaneseq
    %v645 = vshrl.u32 %v644, 7
    %v646 = vsub.s32 %v643, %v645
    %v647 = vrot.slane %v631, %v646
    %v649 = vunpack.c.l.s4 1983009808
    %v650 = vunpack.c.0.s8 %v649
    %v651 = vlaneseq
    %v652 = vshrl.u32 %v651, 7
    %v653 = vsub.s32 %v650, %v652
    %v654 = vrot.slane %v632, %v653
    %v656 = vunpack.c.l.s4 1983009808
    %v657 = vunpack.c.0.s8 %v656
    %v658 = vlaneseq
    %v659 = vshrl.u32 %v658, 7
    %v660 = vsub.s32 %v657, %v659
    %v661 = vrot.slane %v633, %v660
    %v662 = vcombine.low %v640, %v654
    %v663 = vcombine.high %v640, %v654
    %v664 = vcombine.low %v647, %v661
    %v665 = vcombine.high %v647, %v661
    %690 = vmatprep.subr.mxu0 0.0
    %691 = vmatpush1.msra.mxu0 %v42
    %692 = vmatprep.subr.mxu0 0.0
    %693 = vmatpush1.msra.mxu0 %v43
    %694 = vmatprep.subr.mxu0 0.0
    %695 = vmatpush1.msra.mxu0 %v44
    %696 = vmatprep.subr.mxu0 0.0
    %697 = vmatpush1.msra.mxu0 %v45
    %698 = vmatprep.subr.mxu0 0.0
    %699 = vmatpush1.msra.mxu0 %v46
    %700 = vmatprep.subr.mxu0 0.0
    %701 = vmatpush1.msra.mxu0 %v47
    %702 = vmatprep.subr.mxu0 0.0
    %703 = vmatpush1.msra.mxu0 %v48
    %704 = vmatprep.subr.mxu0 0.0
    %705 = vmatpush1.msra.mxu0 %v49
    %706 = vmatprep.subr.mxu0 0.0
    %707 = vmatpush1.msra.mxu0 %v50
    %708 = vmatprep.subr.mxu0 0.0
    %709 = vmatpush1.msra.mxu0 %v51
    %710 = vmatprep.subr.mxu0 0.0
    %711 = vmatpush1.msra.mxu0 %v52
    %712 = vmatprep.subr.mxu0 0.0
    %713 = vmatpush1.msra.mxu0 %v53
    %714 = vmatprep.subr.mxu0 0.0
    %715 = vmatpush1.msra.mxu0 %v54
    %716 = vmatprep.subr.mxu0 0.0
    %717 = vmatpush1.msra.mxu0 %v55
    %718 = vmatprep.subr.mxu0 0.0
    %719 = vmatpush1.msra.mxu0 %v56
    %720 = vmatprep.subr.mxu0 0.0
    %721 = vmatpush1.msra.mxu0 %v57
    %722 = vmatprep.subr.mxu0 0.0
    %723 = vmatpush1.msra.mxu0 %v58
    %724 = vmatprep.subr.mxu0 0.0
    %725 = vmatpush1.msra.mxu0 %v59
    %726 = vmatprep.subr.mxu0 0.0
    %727 = vmatpush1.msra.mxu0 %v60
    %728 = vmatprep.subr.mxu0 0.0
    %729 = vmatpush1.msra.mxu0 %v61
    %730 = vmatprep.subr.mxu0 0.0
    %731 = vmatpush1.msra.mxu0 %v62
    %732 = vmatprep.subr.mxu0 0.0
    %733 = vmatpush1.msra.mxu0 %v63
    %734 = vmatprep.subr.mxu0 0.0
    %735 = vmatpush1.msra.mxu0 %v64
    %736 = vmatprep.subr.mxu0 0.0
    %737 = vmatpush1.msra.mxu0 %v65
    %738 = vmatprep.subr.mxu0 0.0
    %739 = vmatpush1.msra.mxu0 %v66
    %740 = vmatprep.subr.mxu0 0.0
    %741 = vmatpush1.msra.mxu0 %v67
    %742 = vmatprep.subr.mxu0 0.0
    %743 = vmatpush1.msra.mxu0 %v68
    %744 = vmatprep.subr.mxu0 0.0
    %745 = vmatpush1.msra.mxu0 %v69
    %746 = vmatprep.subr.mxu0 0.0
    %747 = vmatpush1.msra.mxu0 %v70
    %748 = vmatprep.subr.mxu0 0.0
    %749 = vmatpush1.msra.mxu0 %v71
    %750 = vmatprep.subr.mxu0 0.0
    %751 = vmatpush1.msra.mxu0 %v72
    %752 = vmatprep.subr.mxu0 0.0
    %753 = vmatpush1.msra.mxu0 %v73
    %754 = vmatprep.mubr.f32.mxu0 %v483
    %755 = vmatmul.mubr.f32.gmra.mrb[0].mxu0 %v482
    %v756 = vpop.f32.mrb[0].mxu0
    %v757 = vadd.f32 0.0, %v756
    %v758 = vpop.f32.mrb[0].mxu0
    %759 = vdwg.mxu0
    %760 = vmatprep.subr.mxu0 0.0
    %761 = vmatpush1.msra.mxu0 %v74
    %762 = vmatprep.subr.mxu0 0.0
    %763 = vmatpush1.msra.mxu0 %v75
    %764 = vmatprep.subr.mxu0 0.0
    %765 = vmatpush1.msra.mxu0 %v76
    %766 = vmatprep.subr.mxu0 0.0
    %767 = vmatpush1.msra.mxu0 %v77
    %768 = vmatprep.subr.mxu0 0.0
    %769 = vmatpush1.msra.mxu0 %v78
    %770 = vmatprep.subr.mxu0 0.0
    %771 = vmatpush1.msra.mxu0 %v79
    %772 = vmatprep.subr.mxu0 0.0
    %773 = vmatpush1.msra.mxu0 %v80
    %774 = vmatprep.subr.mxu0 0.0
    %775 = vmatpush1.msra.mxu0 %v81
    %776 = vmatprep.subr.mxu0 0.0
    %777 = vmatpush1.msra.mxu0 %v82
    %778 = vmatprep.subr.mxu0 0.0
    %779 = vmatpush1.msra.mxu0 %v83
    %780 = vmatprep.subr.mxu0 0.0
    %781 = vmatpush1.msra.mxu0 %v84
    %782 = vmatprep.subr.mxu0 0.0
    %783 = vmatpush1.msra.mxu0 %v85
    %784 = vmatprep.subr.mxu0 0.0
    %785 = vmatpush1.msra.mxu0 %v86
    %786 = vmatprep.subr.mxu0 0.0
    %787 = vmatpush1.msra.mxu0 %v87
    %788 = vmatprep.subr.mxu0 0.0
    %789 = vmatpush1.msra.mxu0 %v88
    %790 = vmatprep.subr.mxu0 0.0
    %791 = vmatpush1.msra.mxu0 %v89
    %792 = vmatprep.subr.mxu0 0.0
    %793 = vmatpush1.msra.mxu0 %v90
    %794 = vmatprep.subr.mxu0 0.0
    %795 = vmatpush1.msra.mxu0 %v91
    %796 = vmatprep.subr.mxu0 0.0
    %797 = vmatpush1.msra.mxu0 %v92
    %798 = vmatprep.subr.mxu0 0.0
    %799 = vmatpush1.msra.mxu0 %v93
    %800 = vmatprep.subr.mxu0 0.0
    %801 = vmatpush1.msra.mxu0 %v94
    %802 = vmatprep.subr.mxu0 0.0
    %803 = vmatpush1.msra.mxu0 %v95
    %804 = vmatprep.subr.mxu0 0.0
    %805 = vmatpush1.msra.mxu0 %v96
    %806 = vmatprep.subr.mxu0 0.0
    %807 = vmatpush1.msra.mxu0 %v97
    %808 = vmatprep.subr.mxu0 0.0
    %809 = vmatpush1.msra.mxu0 %v98
    %810 = vmatprep.subr.mxu0 0.0
    %811 = vmatpush1.msra.mxu0 %v99
    %812 = vmatprep.subr.mxu0 0.0
    %813 = vmatpush1.msra.mxu0 %v100
    %814 = vmatprep.subr.mxu0 0.0
    %815 = vmatpush1.msra.mxu0 %v101
    %816 = vmatprep.subr.mxu0 0.0
    %817 = vmatpush1.msra.mxu0 %v102
    %818 = vmatprep.subr.mxu0 0.0
    %819 = vmatpush1.msra.mxu0 %v103
    %820 = vmatprep.subr.mxu0 0.0
    %821 = vmatpush1.msra.mxu0 %v104
    %822 = vmatprep.subr.mxu0 0.0
    %823 = vmatpush1.msra.mxu0 %v105
    %824 = vmatprep.mubr.f32.mxu0 %v485
    %825 = vmatmul.mubr.f32.gmra.mrb[0].mxu0 %v484
    %v826 = vpop.f32.mrb[0].mxu0
    %v827 = vadd.f32 %v757, %v826
    %v828 = vpop.f32.mrb[0].mxu0
    %829 = vdwg.mxu0
    %830 = vmatprep.subr.mxu0 0.0
    %831 = vmatpush1.msra.mxu0 %v106
    %832 = vmatprep.subr.mxu0 0.0
    %833 = vmatpush1.msra.mxu0 %v107
    %834 = vmatprep.subr.mxu0 0.0
    %835 = vmatpush1.msra.mxu0 %v108
    %836 = vmatprep.subr.mxu0 0.0
    %837 = vmatpush1.msra.mxu0 %v109
    %838 = vmatprep.subr.mxu0 0.0
    %839 = vmatpush1.msra.mxu0 %v110
    %840 = vmatprep.subr.mxu0 0.0
    %841 = vmatpush1.msra.mxu0 %v111
    %842 = vmatprep.subr.mxu0 0.0
    %843 = vmatpush1.msra.mxu0 %v112
    %844 = vmatprep.subr.mxu0 0.0
    %845 = vmatpush1.msra.mxu0 %v113
    %846 = vmatprep.subr.mxu0 0.0
    %847 = vmatpush1.msra.mxu0 %v114
    %848 = vmatprep.subr.mxu0 0.0
    %849 = vmatpush1.msra.mxu0 %v115
    %850 = vmatprep.subr.mxu0 0.0
    %851 = vmatpush1.msra.mxu0 %v116
    %852 = vmatprep.subr.mxu0 0.0
    %853 = vmatpush1.msra.mxu0 %v117
    %854 = vmatprep.subr.mxu0 0.0
    %855 = vmatpush1.msra.mxu0 %v118
    %856 = vmatprep.subr.mxu0 0.0
    %857 = vmatpush1.msra.mxu0 %v119
    %858 = vmatprep.subr.mxu0 0.0
    %859 = vmatpush1.msra.mxu0 %v120
    %860 = vmatprep.subr.mxu0 0.0
    %861 = vmatpush1.msra.mxu0 %v121
    %862 = vmatprep.subr.mxu0 0.0
    %863 = vmatpush1.msra.mxu0 %v122
    %864 = vmatprep.subr.mxu0 0.0
    %865 = vmatpush1.msra.mxu0 %v123
    %866 = vmatprep.subr.mxu0 0.0
    %867 = vmatpush1.msra.mxu0 %v124
    %868 = vmatprep.subr.mxu0 0.0
    %869 = vmatpush1.msra.mxu0 %v125
    %870 = vmatprep.subr.mxu0 0.0
    %871 = vmatpush1.msra.mxu0 %v126
    %872 = vmatprep.subr.mxu0 0.0
    %873 = vmatpush1.msra.mxu0 %v127
    %874 = vmatprep.subr.mxu0 0.0
    %875 = vmatpush1.msra.mxu0 %v128
    %876 = vmatprep.subr.mxu0 0.0
    %877 = vmatpush1.msra.mxu0 %v129
    %878 = vmatprep.subr.mxu0 0.0
    %879 = vmatpush1.msra.mxu0 %v130
    %880 = vmatprep.subr.mxu0 0.0
    %881 = vmatpush1.msra.mxu0 %v131
    %882 = vmatprep.subr.mxu0 0.0
    %883 = vmatpush1.msra.mxu0 %v132
    %884 = vmatprep.subr.mxu0 0.0
    %885 = vmatpush1.msra.mxu0 %v133
    %886 = vmatprep.subr.mxu0 0.0
    %887 = vmatpush1.msra.mxu0 %v134
    %888 = vmatprep.subr.mxu0 0.0
    %889 = vmatpush1.msra.mxu0 %v135
    %890 = vmatprep.subr.mxu0 0.0
    %891 = vmatpush1.msra.mxu0 %v136
    %892 = vmatprep.subr.mxu0 0.0
    %893 = vmatpush1.msra.mxu0 %v137
    %894 = vmatprep.mubr.f32.mxu0 %v519
    %895 = vmatmul.mubr.f32.gmra.mrb[0].mxu0 %v518
    %v896 = vpop.f32.mrb[0].mxu0
    %v897 = vadd.f32 %v827, %v896
    %v898 = vpop.f32.mrb[0].mxu0
    %899 = vdwg.mxu0
    %900 = vmatprep.subr.mxu0 0.0
    %901 = vmatpush1.msra.mxu0 %v138
    %902 = vmatprep.subr.mxu0 0.0
    %903 = vmatpush1.msra.mxu0 %v139
    %904 = vmatprep.subr.mxu0 0.0
    %905 = vmatpush1.msra.mxu0 %v140
    %906 = vmatprep.subr.mxu0 0.0
    %907 = vmatpush1.msra.mxu0 %v141
    %908 = vmatprep.subr.mxu0 0.0
    %909 = vmatpush1.msra.mxu0 %v142
    %910 = vmatprep.subr.mxu0 0.0
    %911 = vmatpush1.msra.mxu0 %v143
    %912 = vmatprep.subr.mxu0 0.0
    %913 = vmatpush1.msra.mxu0 %v144
    %914 = vmatprep.subr.mxu0 0.0
    %915 = vmatpush1.msra.mxu0 %v145
    %916 = vmatprep.subr.mxu0 0.0
    %917 = vmatpush1.msra.mxu0 %v146
    %918 = vmatprep.subr.mxu0 0.0
    %919 = vmatpush1.msra.mxu0 %v147
    %920 = vmatprep.subr.mxu0 0.0
    %921 = vmatpush1.msra.mxu0 %v148
    %922 = vmatprep.subr.mxu0 0.0
    %923 = vmatpush1.msra.mxu0 %v149
    %924 = vmatprep.subr.mxu0 0.0
    %925 = vmatpush1.msra.mxu0 %v150
    %926 = vmatprep.subr.mxu0 0.0
    %927 = vmatpush1.msra.mxu0 %v151
    %928 = vmatprep.subr.mxu0 0.0
    %929 = vmatpush1.msra.mxu0 %v152
    %930 = vmatprep.subr.mxu0 0.0
    %931 = vmatpush1.msra.mxu0 %v153
    %932 = vmatprep.subr.mxu0 0.0
    %933 = vmatpush1.msra.mxu0 %v154
    %934 = vmatprep.subr.mxu0 0.0
    %935 = vmatpush1.msra.mxu0 %v155
    %936 = vmatprep.subr.mxu0 0.0
    %937 = vmatpush1.msra.mxu0 %v156
    %938 = vmatprep.subr.mxu0 0.0
    %939 = vmatpush1.msra.mxu0 %v157
    %940 = vmatprep.subr.mxu0 0.0
    %941 = vmatpush1.msra.mxu0 %v158
    %942 = vmatprep.subr.mxu0 0.0
    %943 = vmatpush1.msra.mxu0 %v159
    %944 = vmatprep.subr.mxu0 0.0
    %945 = vmatpush1.msra.mxu0 %v160
    %946 = vmatprep.subr.mxu0 0.0
    %947 = vmatpush1.msra.mxu0 %v161
    %948 = vmatprep.subr.mxu0 0.0
    %949 = vmatpush1.msra.mxu0 %v162
    %950 = vmatprep.subr.mxu0 0.0
    %951 = vmatpush1.msra.mxu0 %v163
    %952 = vmatprep.subr.mxu0 0.0
    %953 = vmatpush1.msra.mxu0 %v164
    %954 = vmatprep.subr.mxu0 0.0
    %955 = vmatpush1.msra.mxu0 %v165
    %956 = vmatprep.subr.mxu0 0.0
    %957 = vmatpush1.msra.mxu0 %v166
    %958 = vmatprep.subr.mxu0 0.0
    %959 = vmatpush1.msra.mxu0 %v167
    %960 = vmatprep.subr.mxu0 0.0
    %961 = vmatpush1.msra.mxu0 %v168
    %962 = vmatprep.subr.mxu0 0.0
    %963 = vmatpush1.msra.mxu0 %v169
    %964 = vmatprep.mubr.f32.mxu0 %v521
    %965 = vmatmul.mubr.f32.gmra.mrb[0].mxu0 %v520
    %v966 = vpop.f32.mrb[0].mxu0
    %v967 = vadd.f32 %v897, %v966
    %v968 = vpop.f32.mrb[0].mxu0
    %969 = vdwg.mxu0
    %970 = vmatprep.subr.mxu0 0.0
    %971 = vmatpush1.msra.mxu0 %v170
    %972 = vmatprep.subr.mxu0 0.0
    %973 = vmatpush1.msra.mxu0 %v171
    %974 = vmatprep.subr.mxu0 0.0
    %975 = vmatpush1.msra.mxu0 %v172
    %976 = vmatprep.subr.mxu0 0.0
    %977 = vmatpush1.msra.mxu0 %v173
    %978 = vmatprep.subr.mxu0 0.0
    %979 = vmatpush1.msra.mxu0 %v174
    %980 = vmatprep.subr.mxu0 0.0
    %981 = vmatpush1.msra.mxu0 %v175
    %982 = vmatprep.subr.mxu0 0.0
    %983 = vmatpush1.msra.mxu0 %v176
    %984 = vmatprep.subr.mxu0 0.0
    %985 = vmatpush1.msra.mxu0 %v177
    %986 = vmatprep.subr.mxu0 0.0
    %987 = vmatpush1.msra.mxu0 %v178
    %988 = vmatprep.subr.mxu0 0.0
    %989 = vmatpush1.msra.mxu0 %v179
    %990 = vmatprep.subr.mxu0 0.0
    %991 = vmatpush1.msra.mxu0 %v180
    %992 = vmatprep.subr.mxu0 0.0
    %993 = vmatpush1.msra.mxu0 %v181
    %994 = vmatprep.subr.mxu0 0.0
    %995 = vmatpush1.msra.mxu0 %v182
    %996 = vmatprep.subr.mxu0 0.0
    %997 = vmatpush1.msra.mxu0 %v183
    %998 = vmatprep.subr.mxu0 0.0
    %999 = vmatpush1.msra.mxu0 %v184
    %1000 = vmatprep.subr.mxu0 0.0
    %1001 = vmatpush1.msra.mxu0 %v185
    %1002 = vmatprep.subr.mxu0 0.0
    %1003 = vmatpush1.msra.mxu0 %v186
    %1004 = vmatprep.subr.mxu0 0.0
    %1005 = vmatpush1.msra.mxu0 %v187
    %1006 = vmatprep.subr.mxu0 0.0
    %1007 = vmatpush1.msra.mxu0 %v188
    %1008 = vmatprep.subr.mxu0 0.0
    %1009 = vmatpush1.msra.mxu0 %v189
    %1010 = vmatprep.subr.mxu0 0.0
    %1011 = vmatpush1.msra.mxu0 %v190
    %1012 = vmatprep.subr.mxu0 0.0
    %1013 = vmatpush1.msra.mxu0 %v191
    %1014 = vmatprep.subr.mxu0 0.0
    %1015 = vmatpush1.msra.mxu0 %v192
    %1016 = vmatprep.subr.mxu0 0.0
    %1017 = vmatpush1.msra.mxu0 %v193
    %1018 = vmatprep.subr.mxu0 0.0
    %1019 = vmatpush1.msra.mxu0 %v194
    %1020 = vmatprep.subr.mxu0 0.0
    %1021 = vmatpush1.msra.mxu0 %v195
    %1022 = vmatprep.subr.mxu0 0.0
    %1023 = vmatpush1.msra.mxu0 %v196
    %1024 = vmatprep.subr.mxu0 0.0
    %1025 = vmatpush1.msra.mxu0 %v197
    %1026 = vmatprep.subr.mxu0 0.0
    %1027 = vmatpush1.msra.mxu0 %v198
    %1028 = vmatprep.subr.mxu0 0.0
    %1029 = vmatpush1.msra.mxu0 %v199
    %1030 = vmatprep.subr.mxu0 0.0
    %1031 = vmatpush1.msra.mxu0 %v200
    %1032 = vmatprep.subr.mxu0 0.0
    %1033 = vmatpush1.msra.mxu0 %v201
    %1034 = vmatprep.mubr.f32.mxu0 %v555
    %1035 = vmatmul.mubr.f32.gmra.mrb[0].mxu0 %v554
    %v1036 = vpop.f32.mrb[0].mxu0
    %v1037 = vadd.f32 %v967, %v1036
    %v1038 = vpop.f32.mrb[0].mxu0
    %1039 = vdwg.mxu0
    %1040 = vmatprep.subr.mxu0 0.0
    %1041 = vmatpush1.msra.mxu0 %v202
    %1042 = vmatprep.subr.mxu0 0.0
    %1043 = vmatpush1.msra.mxu0 %v203
    %1044 = vmatprep.subr.mxu0 0.0
    %1045 = vmatpush1.msra.mxu0 %v204
    %1046 = vmatprep.subr.mxu0 0.0
    %1047 = vmatpush1.msra.mxu0 %v205
    %1048 = vmatprep.subr.mxu0 0.0
    %1049 = vmatpush1.msra.mxu0 %v206
    %1050 = vmatprep.subr.mxu0 0.0
    %1051 = vmatpush1.msra.mxu0 %v207
    %1052 = vmatprep.subr.mxu0 0.0
    %1053 = vmatpush1.msra.mxu0 %v208
    %1054 = vmatprep.subr.mxu0 0.0
    %1055 = vmatpush1.msra.mxu0 %v209
    %1056 = vmatprep.subr.mxu0 0.0
    %1057 = vmatpush1.msra.mxu0 %v210
    %1058 = vmatprep.subr.mxu0 0.0
    %1059 = vmatpush1.msra.mxu0 %v211
    %1060 = vmatprep.subr.mxu0 0.0
    %1061 = vmatpush1.msra.mxu0 %v212
    %1062 = vmatprep.subr.mxu0 0.0
    %1063 = vmatpush1.msra.mxu0 %v213
    %1064 = vmatprep.subr.mxu0 0.0
    %1065 = vmatpush1.msra.mxu0 %v214
    %1066 = vmatprep.subr.mxu0 0.0
    %1067 = vmatpush1.msra.mxu0 %v215
    %1068 = vmatprep.subr.mxu0 0.0
    %1069 = vmatpush1.msra.mxu0 %v216
    %1070 = vmatprep.subr.mxu0 0.0
    %1071 = vmatpush1.msra.mxu0 %v217
    %1072 = vmatprep.subr.mxu0 0.0
    %1073 = vmatpush1.msra.mxu0 %v218
    %1074 = vmatprep.subr.mxu0 0.0
    %1075 = vmatpush1.msra.mxu0 %v219
    %1076 = vmatprep.subr.mxu0 0.0
    %1077 = vmatpush1.msra.mxu0 %v220
    %1078 = vmatprep.subr.mxu0 0.0
    %1079 = vmatpush1.msra.mxu0 %v221
    %1080 = vmatprep.subr.mxu0 0.0
    %1081 = vmatpush1.msra.mxu0 %v222
    %1082 = vmatprep.subr.mxu0 0.0
    %1083 = vmatpush1.msra.mxu0 %v223
    %1084 = vmatprep.subr.mxu0 0.0
    %1085 = vmatpush1.msra.mxu0 %v224
    %1086 = vmatprep.subr.mxu0 0.0
    %1087 = vmatpush1.msra.mxu0 %v225
    %1088 = vmatprep.subr.mxu0 0.0
    %1089 = vmatpush1.msra.mxu0 %v226
    %1090 = vmatprep.subr.mxu0 0.0
    %1091 = vmatpush1.msra.mxu0 %v227
    %1092 = vmatprep.subr.mxu0 0.0
    %1093 = vmatpush1.msra.mxu0 %v228
    %1094 = vmatprep.subr.mxu0 0.0
    %1095 = vmatpush1.msra.mxu0 %v229
    %1096 = vmatprep.subr.mxu0 0.0
    %1097 = vmatpush1.msra.mxu0 %v230
    %1098 = vmatprep.subr.mxu0 0.0
    %1099 = vmatpush1.msra.mxu0 %v231
    %1100 = vmatprep.subr.mxu0 0.0
    %1101 = vmatpush1.msra.mxu0 %v232
    %1102 = vmatprep.subr.mxu0 0.0
    %1103 = vmatpush1.msra.mxu0 %v233
    %1104 = vmatprep.mubr.f32.mxu0 %v557
    %1105 = vmatmul.mubr.f32.gmra.mrb[0].mxu0 %v556
    %v1106 = vpop.f32.mrb[0].mxu0
    %v1107 = vadd.f32 %v1037, %v1106
    %v1108 = vpop.f32.mrb[0].mxu0
    %1109 = vdwg.mxu0
    %1110 = vmatprep.subr.mxu0 0.0
    %1111 = vmatpush1.msra.mxu0 %v234
    %1112 = vmatprep.subr.mxu0 0.0
    %1113 = vmatpush1.msra.mxu0 %v235
    %1114 = vmatprep.subr.mxu0 0.0
    %1115 = vmatpush1.msra.mxu0 %v236
    %1116 = vmatprep.subr.mxu0 0.0
    %1117 = vmatpush1.msra.mxu0 %v237
    %1118 = vmatprep.subr.mxu0 0.0
    %1119 = vmatpush1.msra.mxu0 %v238
    %1120 = vmatprep.subr.mxu0 0.0
    %1121 = vmatpush1.msra.mxu0 %v239
    %1122 = vmatprep.subr.mxu0 0.0
    %1123 = vmatpush1.msra.mxu0 %v240
    %1124 = vmatprep.subr.mxu0 0.0
    %1125 = vmatpush1.msra.mxu0 %v241
    %1126 = vmatprep.subr.mxu0 0.0
    %1127 = vmatpush1.msra.mxu0 %v242
    %1128 = vmatprep.subr.mxu0 0.0
    %1129 = vmatpush1.msra.mxu0 %v243
    %1130 = vmatprep.subr.mxu0 0.0
    %1131 = vmatpush1.msra.mxu0 %v244
    %1132 = vmatprep.subr.mxu0 0.0
    %1133 = vmatpush1.msra.mxu0 %v245
    %1134 = vmatprep.subr.mxu0 0.0
    %1135 = vmatpush1.msra.mxu0 %v246
    %1136 = vmatprep.subr.mxu0 0.0
    %1137 = vmatpush1.msra.mxu0 %v247
    %1138 = vmatprep.subr.mxu0 0.0
    %1139 = vmatpush1.msra.mxu0 %v248
    %1140 = vmatprep.subr.mxu0 0.0
    %1141 = vmatpush1.msra.mxu0 %v249
    %1142 = vmatprep.subr.mxu0 0.0
    %1143 = vmatpush1.msra.mxu0 %v250
    %1144 = vmatprep.subr.mxu0 0.0
    %1145 = vmatpush1.msra.mxu0 %v251
    %1146 = vmatprep.subr.mxu0 0.0
    %1147 = vmatpush1.msra.mxu0 %v252
    %1148 = vmatprep.subr.mxu0 0.0
    %1149 = vmatpush1.msra.mxu0 %v253
    %1150 = vmatprep.subr.mxu0 0.0
    %1151 = vmatpush1.msra.mxu0 %v254
    %1152 = vmatprep.subr.mxu0 0.0
    %1153 = vmatpush1.msra.mxu0 %v255
    %1154 = vmatprep.subr.mxu0 0.0
    %1155 = vmatpush1.msra.mxu0 %v256
    %1156 = vmatprep.subr.mxu0 0.0
    %1157 = vmatpush1.msra.mxu0 %v257
    %1158 = vmatprep.subr.mxu0 0.0
    %1159 = vmatpush1.msra.mxu0 %v258
    %1160 = vmatprep.subr.mxu0 0.0
    %1161 = vmatpush1.msra.mxu0 %v259
    %1162 = vmatprep.subr.mxu0 0.0
    %1163 = vmatpush1.msra.mxu0 %v260
    %1164 = vmatprep.subr.mxu0 0.0
    %1165 = vmatpush1.msra.mxu0 %v261
    %1166 = vmatprep.subr.mxu0 0.0
    %1167 = vmatpush1.msra.mxu0 %v262
    %1168 = vmatprep.subr.mxu0 0.0
    %1169 = vmatpush1.msra.mxu0 %v263
    %1170 = vmatprep.subr.mxu0 0.0
    %1171 = vmatpush1.msra.mxu0 %v264
    %1172 = vmatprep.subr.mxu0 0.0
    %1173 = vmatpush1.msra.mxu0 %v265
    %1174 = vmatprep.mubr.f32.mxu0 %v591
    %1175 = vmatmul.mubr.f32.gmra.mrb[0].mxu0 %v590
    %v1176 = vpop.f32.mrb[0].mxu0
    %v1177 = vadd.f32 %v1107, %v1176
    %v1178 = vpop.f32.mrb[0].mxu0
    %1179 = vdwg.mxu0
    %1180 = vmatprep.subr.mxu0 0.0
    %1181 = vmatpush1.msra.mxu0 %v266
    %1182 = vmatprep.subr.mxu0 0.0
    %1183 = vmatpush1.msra.mxu0 %v267
    %1184 = vmatprep.subr.mxu0 0.0
    %1185 = vmatpush1.msra.mxu0 %v268
    %1186 = vmatprep.subr.mxu0 0.0
    %1187 = vmatpush1.msra.mxu0 %v269
    %1188 = vmatprep.subr.mxu0 0.0
    %1189 = vmatpush1.msra.mxu0 %v270
    %1190 = vmatprep.subr.mxu0 0.0
    %1191 = vmatpush1.msra.mxu0 %v271
    %1192 = vmatprep.subr.mxu0 0.0
    %1193 = vmatpush1.msra.mxu0 %v272
    %1194 = vmatprep.subr.mxu0 0.0
    %1195 = vmatpush1.msra.mxu0 %v273
    %1196 = vmatprep.subr.mxu0 0.0
    %1197 = vmatpush1.msra.mxu0 %v274
    %1198 = vmatprep.subr.mxu0 0.0
    %1199 = vmatpush1.msra.mxu0 %v275
    %1200 = vmatprep.subr.mxu0 0.0
    %1201 = vmatpush1.msra.mxu0 %v276
    %1202 = vmatprep.subr.mxu0 0.0
    %1203 = vmatpush1.msra.mxu0 %v277
    %1204 = vmatprep.subr.mxu0 0.0
    %1205 = vmatpush1.msra.mxu0 %v278
    %1206 = vmatprep.subr.mxu0 0.0
    %1207 = vmatpush1.msra.mxu0 %v279
    %1208 = vmatprep.subr.mxu0 0.0
    %1209 = vmatpush1.msra.mxu0 %v280
    %1210 = vmatprep.subr.mxu0 0.0
    %1211 = vmatpush1.msra.mxu0 %v281
    %1212 = vmatprep.subr.mxu0 0.0
    %1213 = vmatpush1.msra.mxu0 %v282
    %1214 = vmatprep.subr.mxu0 0.0
    %1215 = vmatpush1.msra.mxu0 %v283
    %1216 = vmatprep.subr.mxu0 0.0
    %1217 = vmatpush1.msra.mxu0 %v284
    %1218 = vmatprep.subr.mxu0 0.0
    %1219 = vmatpush1.msra.mxu0 %v285
    %1220 = vmatprep.subr.mxu0 0.0
    %1221 = vmatpush1.msra.mxu0 %v286
    %1222 = vmatprep.subr.mxu0 0.0
    %1223 = vmatpush1.msra.mxu0 %v287
    %1224 = vmatprep.subr.mxu0 0.0
    %1225 = vmatpush1.msra.mxu0 %v288
    %1226 = vmatprep.subr.mxu0 0.0
    %1227 = vmatpush1.msra.mxu0 %v289
    %1228 = vmatprep.subr.mxu0 0.0
    %1229 = vmatpush1.msra.mxu0 %v290
    %1230 = vmatprep.subr.mxu0 0.0
    %1231 = vmatpush1.msra.mxu0 %v291
    %1232 = vmatprep.subr.mxu0 0.0
    %1233 = vmatpush1.msra.mxu0 %v292
    %1234 = vmatprep.subr.mxu0 0.0
    %1235 = vmatpush1.msra.mxu0 %v293
    %1236 = vmatprep.subr.mxu0 0.0
    %1237 = vmatpush1.msra.mxu0 %v294
    %1238 = vmatprep.subr.mxu0 0.0
    %1239 = vmatpush1.msra.mxu0 %v295
    %1240 = vmatprep.subr.mxu0 0.0
    %1241 = vmatpush1.msra.mxu0 %v296
    %1242 = vmatprep.subr.mxu0 0.0
    %1243 = vmatpush1.msra.mxu0 %v297
    %1244 = vmatprep.mubr.f32.mxu0 %v593
    %1245 = vmatmul.mubr.f32.gmra.mrb[0].mxu0 %v592
    %v1246 = vpop.f32.mrb[0].mxu0
    %v1247 = vadd.f32 %v1177, %v1246
    %v1248 = vpop.f32.mrb[0].mxu0
    %1249 = vdwg.mxu0
    %1250 = vmatprep.subr.mxu0 0.0
    %1251 = vmatpush1.msra.mxu0 %v298
    %1252 = vmatprep.subr.mxu0 0.0
    %1253 = vmatpush1.msra.mxu0 %v299
    %1254 = vmatprep.subr.mxu0 0.0
    %1255 = vmatpush1.msra.mxu0 %v300
    %1256 = vmatprep.subr.mxu0 0.0
    %1257 = vmatpush1.msra.mxu0 %v301
    %1258 = vmatprep.subr.mxu0 0.0
    %1259 = vmatpush1.msra.mxu0 %v302
    %1260 = vmatprep.subr.mxu0 0.0
    %1261 = vmatpush1.msra.mxu0 %v303
    %1262 = vmatprep.subr.mxu0 0.0
    %1263 = vmatpush1.msra.mxu0 %v304
    %1264 = vmatprep.subr.mxu0 0.0
    %1265 = vmatpush1.msra.mxu0 %v305
    %1266 = vmatprep.subr.mxu0 0.0
    %1267 = vmatpush1.msra.mxu0 %v306
    %1268 = vmatprep.subr.mxu0 0.0
    %1269 = vmatpush1.msra.mxu0 %v307
    %1270 = vmatprep.subr.mxu0 0.0
    %1271 = vmatpush1.msra.mxu0 %v308
    %1272 = vmatprep.subr.mxu0 0.0
    %1273 = vmatpush1.msra.mxu0 %v309
    %1274 = vmatprep.subr.mxu0 0.0
    %1275 = vmatpush1.msra.mxu0 %v310
    %1276 = vmatprep.subr.mxu0 0.0
    %1277 = vmatpush1.msra.mxu0 %v311
    %1278 = vmatprep.subr.mxu0 0.0
    %1279 = vmatpush1.msra.mxu0 %v312
    %1280 = vmatprep.subr.mxu0 0.0
    %1281 = vmatpush1.msra.mxu0 %v313
    %1282 = vmatprep.subr.mxu0 0.0
    %1283 = vmatpush1.msra.mxu0 %v314
    %1284 = vmatprep.subr.mxu0 0.0
    %1285 = vmatpush1.msra.mxu0 %v315
    %1286 = vmatprep.subr.mxu0 0.0
    %1287 = vmatpush1.msra.mxu0 %v316
    %1288 = vmatprep.subr.mxu0 0.0
    %1289 = vmatpush1.msra.mxu0 %v317
    %1290 = vmatprep.subr.mxu0 0.0
    %1291 = vmatpush1.msra.mxu0 %v318
    %1292 = vmatprep.subr.mxu0 0.0
    %1293 = vmatpush1.msra.mxu0 %v319
    %1294 = vmatprep.subr.mxu0 0.0
    %1295 = vmatpush1.msra.mxu0 %v320
    %1296 = vmatprep.subr.mxu0 0.0
    %1297 = vmatpush1.msra.mxu0 %v321
    %1298 = vmatprep.subr.mxu0 0.0
    %1299 = vmatpush1.msra.mxu0 %v322
    %1300 = vmatprep.subr.mxu0 0.0
    %1301 = vmatpush1.msra.mxu0 %v323
    %1302 = vmatprep.subr.mxu0 0.0
    %1303 = vmatpush1.msra.mxu0 %v324
    %1304 = vmatprep.subr.mxu0 0.0
    %1305 = vmatpush1.msra.mxu0 %v325
    %1306 = vmatprep.subr.mxu0 0.0
    %1307 = vmatpush1.msra.mxu0 %v326
    %1308 = vmatprep.subr.mxu0 0.0
    %1309 = vmatpush1.msra.mxu0 %v327
    %1310 = vmatprep.subr.mxu0 0.0
    %1311 = vmatpush1.msra.mxu0 %v328
    %1312 = vmatprep.subr.mxu0 0.0
    %1313 = vmatpush1.msra.mxu0 %v329
    %1314 = vmatprep.mubr.f32.mxu0 %v627
    %1315 = vmatmul.mubr.f32.gmra.mrb[0].mxu0 %v626
    %v1316 = vpop.f32.mrb[0].mxu0
    %v1317 = vadd.f32 %v1247, %v1316
    %v1318 = vpop.f32.mrb[0].mxu0
    %1319 = vdwg.mxu0
    %1320 = vmatprep.subr.mxu0 0.0
    %1321 = vmatpush1.msra.mxu0 %v330
    %1322 = vmatprep.subr.mxu0 0.0
    %1323 = vmatpush1.msra.mxu0 %v331
    %1324 = vmatprep.subr.mxu0 0.0
    %1325 = vmatpush1.msra.mxu0 %v332
    %1326 = vmatprep.subr.mxu0 0.0
    %1327 = vmatpush1.msra.mxu0 %v333
    %1328 = vmatprep.subr.mxu0 0.0
    %1329 = vmatpush1.msra.mxu0 %v334
    %1330 = vmatprep.subr.mxu0 0.0
    %1331 = vmatpush1.msra.mxu0 %v335
    %1332 = vmatprep.subr.mxu0 0.0
    %1333 = vmatpush1.msra.mxu0 %v336
    %1334 = vmatprep.subr.mxu0 0.0
    %1335 = vmatpush1.msra.mxu0 %v337
    %1336 = vmatprep.subr.mxu0 0.0
    %1337 = vmatpush1.msra.mxu0 %v338
    %1338 = vmatprep.subr.mxu0 0.0
    %1339 = vmatpush1.msra.mxu0 %v339
    %1340 = vmatprep.subr.mxu0 0.0
    %1341 = vmatpush1.msra.mxu0 %v340
    %1342 = vmatprep.subr.mxu0 0.0
    %1343 = vmatpush1.msra.mxu0 %v341
    %1344 = vmatprep.subr.mxu0 0.0
    %1345 = vmatpush1.msra.mxu0 %v342
    %1346 = vmatprep.subr.mxu0 0.0
    %1347 = vmatpush1.msra.mxu0 %v343
    %1348 = vmatprep.subr.mxu0 0.0
    %1349 = vmatpush1.msra.mxu0 %v344
    %1350 = vmatprep.subr.mxu0 0.0
    %1351 = vmatpush1.msra.mxu0 %v345
    %1352 = vmatprep.subr.mxu0 0.0
    %1353 = vmatpush1.msra.mxu0 %v346
    %1354 = vmatprep.subr.mxu0 0.0
    %1355 = vmatpush1.msra.mxu0 %v347
    %1356 = vmatprep.subr.mxu0 0.0
    %1357 = vmatpush1.msra.mxu0 %v348
    %1358 = vmatprep.subr.mxu0 0.0
    %1359 = vmatpush1.msra.mxu0 %v349
    %1360 = vmatprep.subr.mxu0 0.0
    %1361 = vmatpush1.msra.mxu0 %v350
    %1362 = vmatprep.subr.mxu0 0.0
    %1363 = vmatpush1.msra.mxu0 %v351
    %1364 = vmatprep.subr.mxu0 0.0
    %1365 = vmatpush1.msra.mxu0 %v352
    %1366 = vmatprep.subr.mxu0 0.0
    %1367 = vmatpush1.msra.mxu0 %v353
    %1368 = vmatprep.subr.mxu0 0.0
    %1369 = vmatpush1.msra.mxu0 %v354
    %1370 = vmatprep.subr.mxu0 0.0
    %1371 = vmatpush1.msra.mxu0 %v355
    %1372 = vmatprep.subr.mxu0 0.0
    %1373 = vmatpush1.msra.mxu0 %v356
    %1374 = vmatprep.subr.mxu0 0.0
    %1375 = vmatpush1.msra.mxu0 %v357
    %1376 = vmatprep.subr.mxu0 0.0
    %1377 = vmatpush1.msra.mxu0 %v358
    %1378 = vmatprep.subr.mxu0 0.0
    %1379 = vmatpush1.msra.mxu0 %v359
    %1380 = vmatprep.subr.mxu0 0.0
    %1381 = vmatpush1.msra.mxu0 %v360
    %1382 = vmatprep.subr.mxu0 0.0
    %1383 = vmatpush1.msra.mxu0 %v361
    %1384 = vmatprep.mubr.f32.mxu0 %v629
    %1385 = vmatmul.mubr.f32.gmra.mrb[0].mxu0 %v628
    %v1386 = vpop.f32.mrb[0].mxu0
    %v1387 = vadd.f32 %v1317, %v1386
    %v1388 = vpop.f32.mrb[0].mxu0
    %1389 = vdwg.mxu0
    %1390 = vmatprep.subr.mxu0 0.0
    %1391 = vmatpush1.msra.mxu0 %v362
    %1392 = vmatprep.subr.mxu0 0.0
    %1393 = vmatpush1.msra.mxu0 %v363
    %1394 = vmatprep.subr.mxu0 0.0
    %1395 = vmatpush1.msra.mxu0 %v364
    %1396 = vmatprep.subr.mxu0 0.0
    %1397 = vmatpush1.msra.mxu0 %v365
    %1398 = vmatprep.subr.mxu0 0.0
    %1399 = vmatpush1.msra.mxu0 %v366
    %1400 = vmatprep.subr.mxu0 0.0
    %1401 = vmatpush1.msra.mxu0 %v367
    %1402 = vmatprep.subr.mxu0 0.0
    %1403 = vmatpush1.msra.mxu0 %v368
    %1404 = vmatprep.subr.mxu0 0.0
    %1405 = vmatpush1.msra.mxu0 %v369
    %1406 = vmatprep.subr.mxu0 0.0
    %1407 = vmatpush1.msra.mxu0 %v370
    %1408 = vmatprep.subr.mxu0 0.0
    %1409 = vmatpush1.msra.mxu0 %v371
    %1410 = vmatprep.subr.mxu0 0.0
    %1411 = vmatpush1.msra.mxu0 %v372
    %1412 = vmatprep.subr.mxu0 0.0
    %1413 = vmatpush1.msra.mxu0 %v373
    %1414 = vmatprep.subr.mxu0 0.0
    %1415 = vmatpush1.msra.mxu0 %v374
    %1416 = vmatprep.subr.mxu0 0.0
    %1417 = vmatpush1.msra.mxu0 %v375
    %1418 = vmatprep.subr.mxu0 0.0
    %1419 = vmatpush1.msra.mxu0 %v376
    %1420 = vmatprep.subr.mxu0 0.0
    %1421 = vmatpush1.msra.mxu0 %v377
    %1422 = vmatprep.subr.mxu0 0.0
    %1423 = vmatpush1.msra.mxu0 %v378
    %1424 = vmatprep.subr.mxu0 0.0
    %1425 = vmatpush1.msra.mxu0 %v379
    %1426 = vmatprep.subr.mxu0 0.0
    %1427 = vmatpush1.msra.mxu0 %v380
    %1428 = vmatprep.subr.mxu0 0.0
    %1429 = vmatpush1.msra.mxu0 %v381
    %1430 = vmatprep.subr.mxu0 0.0
    %1431 = vmatpush1.msra.mxu0 %v382
    %1432 = vmatprep.subr.mxu0 0.0
    %1433 = vmatpush1.msra.mxu0 %v383
    %1434 = vmatprep.subr.mxu0 0.0
    %1435 = vmatpush1.msra.mxu0 %v384
    %1436 = vmatprep.subr.mxu0 0.0
    %1437 = vmatpush1.msra.mxu0 %v385
    %1438 = vmatprep.subr.mxu0 0.0
    %1439 = vmatpush1.msra.mxu0 %v386
    %1440 = vmatprep.subr.mxu0 0.0
    %1441 = vmatpush1.msra.mxu0 %v387
    %1442 = vmatprep.subr.mxu0 0.0
    %1443 = vmatpush1.msra.mxu0 %v388
    %1444 = vmatprep.subr.mxu0 0.0
    %1445 = vmatpush1.msra.mxu0 %v389
    %1446 = vmatprep.subr.mxu0 0.0
    %1447 = vmatpush1.msra.mxu0 %v390
    %1448 = vmatprep.subr.mxu0 0.0
    %1449 = vmatpush1.msra.mxu0 %v391
    %1450 = vmatprep.subr.mxu0 0.0
    %1451 = vmatpush1.msra.mxu0 %v392
    %1452 = vmatprep.subr.mxu0 0.0
    %1453 = vmatpush1.msra.mxu0 %v393
    %1454 = vmatprep.mubr.f32.mxu0 %v663
    %1455 = vmatmul.mubr.f32.gmra.mrb[0].mxu0 %v662
    %v1456 = vpop.f32.mrb[0].mxu0
    %v1457 = vadd.f32 %v1387, %v1456
    %v1458 = vpop.f32.mrb[0].mxu0
    %1459 = vdwg.mxu0
    %1460 = vmatprep.subr.mxu0 0.0
    %1461 = vmatpush1.msra.mxu0 %v394
    %1462 = vmatprep.subr.mxu0 0.0
    %1463 = vmatpush1.msra.mxu0 %v395
    %1464 = vmatprep.subr.mxu0 0.0
    %1465 = vmatpush1.msra.mxu0 %v396
    %1466 = vmatprep.subr.mxu0 0.0
    %1467 = vmatpush1.msra.mxu0 %v397
    %1468 = vmatprep.subr.mxu0 0.0
    %1469 = vmatpush1.msra.mxu0 %v398
    %1470 = vmatprep.subr.mxu0 0.0
    %1471 = vmatpush1.msra.mxu0 %v399
    %1472 = vmatprep.subr.mxu0 0.0
    %1473 = vmatpush1.msra.mxu0 %v400
    %1474 = vmatprep.subr.mxu0 0.0
    %1475 = vmatpush1.msra.mxu0 %v401
    %1476 = vmatprep.subr.mxu0 0.0
    %1477 = vmatpush1.msra.mxu0 %v402
    %1478 = vmatprep.subr.mxu0 0.0
    %1479 = vmatpush1.msra.mxu0 %v403
    %1480 = vmatprep.subr.mxu0 0.0
    %1481 = vmatpush1.msra.mxu0 %v404
    %1482 = vmatprep.subr.mxu0 0.0
    %1483 = vmatpush1.msra.mxu0 %v405
    %1484 = vmatprep.subr.mxu0 0.0
    %1485 = vmatpush1.msra.mxu0 %v406
    %1486 = vmatprep.subr.mxu0 0.0
    %1487 = vmatpush1.msra.mxu0 %v407
    %1488 = vmatprep.subr.mxu0 0.0
    %1489 = vmatpush1.msra.mxu0 %v408
    %1490 = vmatprep.subr.mxu0 0.0
    %1491 = vmatpush1.msra.mxu0 %v409
    %1492 = vmatprep.subr.mxu0 0.0
    %1493 = vmatpush1.msra.mxu0 %v410
    %1494 = vmatprep.subr.mxu0 0.0
    %1495 = vmatpush1.msra.mxu0 %v411
    %1496 = vmatprep.subr.mxu0 0.0
    %1497 = vmatpush1.msra.mxu0 %v412
    %1498 = vmatprep.subr.mxu0 0.0
    %1499 = vmatpush1.msra.mxu0 %v413
    %1500 = vmatprep.subr.mxu0 0.0
    %1501 = vmatpush1.msra.mxu0 %v414
    %1502 = vmatprep.subr.mxu0 0.0
    %1503 = vmatpush1.msra.mxu0 %v415
    %1504 = vmatprep.subr.mxu0 0.0
    %1505 = vmatpush1.msra.mxu0 %v416
    %1506 = vmatprep.subr.mxu0 0.0
    %1507 = vmatpush1.msra.mxu0 %v417
    %1508 = vmatprep.subr.mxu0 0.0
    %1509 = vmatpush1.msra.mxu0 %v418
    %1510 = vmatprep.subr.mxu0 0.0
    %1511 = vmatpush1.msra.mxu0 %v419
    %1512 = vmatprep.subr.mxu0 0.0
    %1513 = vmatpush1.msra.mxu0 %v420
    %1514 = vmatprep.subr.mxu0 0.0
    %1515 = vmatpush1.msra.mxu0 %v421
    %1516 = vmatprep.subr.mxu0 0.0
    %1517 = vmatpush1.msra.mxu0 %v422
    %1518 = vmatprep.subr.mxu0 0.0
    %1519 = vmatpush1.msra.mxu0 %v423
    %1520 = vmatprep.subr.mxu0 0.0
    %1521 = vmatpush1.msra.mxu0 %v424
    %1522 = vmatprep.subr.mxu0 0.0
    %1523 = vmatpush1.msra.mxu0 %v425
    %1524 = vmatprep.mubr.f32.mxu0 %v665
    %1525 = vmatmul.mubr.f32.gmra.mrb[0].mxu0 %v664
    %v1526 = vpop.f32.mrb[0].mxu0
    %v1527 = vadd.f32 %v1457, %v1526
    %v1528 = vpop.f32.mrb[0].mxu0
    %1529 = vdwg.mxu0
    %v1530 = vmul.f32 %v1527, 0.5
    %v1531 = vmul.f32 %v1527, 0.70710677
    %v1532 = verf.f32.pop %v1531
    %v1533 = vadd.f32 %v1532, 1.0
    %v1534 = vmul.f32 %v1530, %v1533
    %v1535 = vld [vmem:[%s2] sm:$0xff]
    %v1536 = vld [vmem:[%s2 + $0x8] sm:$0xff]
    %v1537 = vld [vmem:[%s2 + $0x10] sm:$0xff]
    %v1538 = vld [vmem:[%s2 + $0x18] sm:$0xff]
    %v1539 = vld [vmem:[%s2 + $0x20] sm:$0xff]
    %v1540 = vld [vmem:[%s2 + $0x28] sm:$0xff]
    %v1541 = vld [vmem:[%s2 + $0x30] sm:$0xff]
    %v1542 = vld [vmem:[%s2 + $0x38] sm:$0xff]
    %v1543 = vld [vmem:[%s2 + $0x40] sm:$0xff]
    %v1544 = vld [vmem:[%s2 + $0x48] sm:$0xff]
    %v1545 = vld [vmem:[%s2 + $0x50] sm:$0xff]
    %v1546 = vld [vmem:[%s2 + $0x58] sm:$0xff]
    %v1547 = vld [vmem:[%s2 + $0x60] sm:$0xff]
    %v1548 = vld [vmem:[%s2 + $0x68] sm:$0xff]
    %v1549 = vld [vmem:[%s2 + $0x70] sm:$0xff]
    %v1550 = vld [vmem:[%s2 + $0x78] sm:$0xff]
    %1551 = vmatprep.subr.mxu0 0.0
    %1552 = vmatpush1.msra.mxu0 %v1535
    %1553 = vmatprep.subr.mxu0 0.0
    %1554 = vmatpush1.msra.mxu0 %v1536
    %1555 = vmatprep.subr.mxu0 0.0
    %1556 = vmatpush1.msra.mxu0 %v1537
    %1557 = vmatprep.subr.mxu0 0.0
    %1558 = vmatpush1.msra.mxu0 %v1538
    %1559 = vmatprep.subr.mxu0 0.0
    %1560 = vmatpush1.msra.mxu0 %v1539
    %1561 = vmatprep.subr.mxu0 0.0
    %1562 = vmatpush1.msra.mxu0 %v1540
    %1563 = vmatprep.subr.mxu0 0.0
    %1564 = vmatpush1.msra.mxu0 %v1541
    %1565 = vmatprep.subr.mxu0 0.0
    %1566 = vmatpush1.msra.mxu0 %v1542
    %1567 = vmatprep.subr.mxu0 0.0
    %1568 = vmatpush1.msra.mxu0 %v1543
    %1569 = vmatprep.subr.mxu0 0.0
    %1570 = vmatpush1.msra.mxu0 %v1544
    %1571 = vmatprep.subr.mxu0 0.0
    %1572 = vmatpush1.msra.mxu0 %v1545
    %1573 = vmatprep.subr.mxu0 0.0
    %1574 = vmatpush1.msra.mxu0 %v1546
    %1575 = vmatprep.subr.mxu0 0.0
    %1576 = vmatpush1.msra.mxu0 %v1547
    %1577 = vmatprep.subr.mxu0 0.0
    %1578 = vmatpush1.msra.mxu0 %v1548
    %1579 = vmatprep.subr.mxu0 0.0
    %1580 = vmatpush1.msra.mxu0 %v1549
    %1581 = vmatprep.subr.mxu0 0.0
    %1582 = vmatpush1.msra.mxu0 %v1550
    %1583 = vmatprep.subr.mxu0 0.0
    %1584 = vmatpush1.msra.mxu0 0.0
    %1585 = vmatprep.subr.mxu0 0.0
    %1586 = vmatpush1.msra.mxu0 0.0
    %1587 = vmatprep.subr.mxu0 0.0
    %1588 = vmatpush1.msra.mxu0 0.0
    %1589 = vmatprep.subr.mxu0 0.0
    %1590 = vmatpush1.msra.mxu0 0.0
    %1591 = vmatprep.subr.mxu0 0.0
    %1592 = vmatpush1.msra.mxu0 0.0
    %1593 = vmatprep.subr.mxu0 0.0
    %1594 = vmatpush1.msra.mxu0 0.0
    %1595 = vmatprep.subr.mxu0 0.0
    %1596 = vmatpush1.msra.mxu0 0.0
    %1597 = vmatprep.subr.mxu0 0.0
    %1598 = vmatpush1.msra.mxu0 0.0
    %1599 = vmatprep.subr.mxu0 0.0
    %1600 = vmatpush1.msra.mxu0 0.0
    %1601 = vmatprep.subr.mxu0 0.0
    %1602 = vmatpush1.msra.mxu0 0.0
    %1603 = vmatprep.subr.mxu0 0.0
    %1604 = vmatpush1.msra.mxu0 0.0
    %1605 = vmatprep.subr.mxu0 0.0
    %1606 = vmatpush1.msra.mxu0 0.0
    %1607 = vmatprep.subr.mxu0 0.0
    %1608 = vmatpush1.msra.mxu0 0.0
    %1609 = vmatprep.subr.mxu0 0.0
    %1610 = vmatpush1.msra.mxu0 0.0
    %1611 = vmatprep.subr.mxu0 0.0
    %1612 = vmatpush1.msra.mxu0 0.0
    %1613 = vmatprep.subr.mxu0 0.0
    %1614 = vmatpush1.msra.mxu0 0.0
    %1615 = vmatprep.mubr.f32.mxu0 0.0
    %1616 = vmatmul.mubr.f32.gmra.mrb[0].mxu0 %v1534
    %v1617 = vpop.f32.mrb[0].mxu0
    %v1618 = vadd.f32 0.0, %v1617
    %v1619 = vpop.f32.mrb[0].mxu0
    %1620 = vdwg.mxu0
    %v1621 = vmul.f32 %v1618, 0.5
    %v1622 = vmul.f32 %v1618, 0.70710677
    %v1623 = verf.f32.pop %v1622
    %v1624 = vadd.f32 %v1623, 1.0
    %v1625 = vmul.f32 %v1621, %v1624
    %s1626 = scalar_lea.vmem %s2, 128
    %v1627 = vld [vmem:[%s1626] sm:$0xff]
    %v1628 = vld [vmem:[%s1626 + $0x8] sm:$0xff]
    %v1629 = vld [vmem:[%s1626 + $0x10] sm:$0xff]
    %v1630 = vld [vmem:[%s1626 + $0x18] sm:$0xff]
    %v1631 = vld [vmem:[%s1626 + $0x20] sm:$0xff]
    %v1632 = vld [vmem:[%s1626 + $0x28] sm:$0xff]
    %v1633 = vld [vmem:[%s1626 + $0x30] sm:$0xff]
    %v1634 = vld [vmem:[%s1626 + $0x38] sm:$0xff]
    %v1635 = vld [vmem:[%s1626 + $0x40] sm:$0xff]
    %v1636 = vld [vmem:[%s1626 + $0x48] sm:$0xff]
    %v1637 = vld [vmem:[%s1626 + $0x50] sm:$0xff]
    %v1638 = vld [vmem:[%s1626 + $0x58] sm:$0xff]
    %v1639 = vld [vmem:[%s1626 + $0x60] sm:$0xff]
    %v1640 = vld [vmem:[%s1626 + $0x68] sm:$0xff]
    %v1641 = vld [vmem:[%s1626 + $0x70] sm:$0xff]
    %v1642 = vld [vmem:[%s1626 + $0x78] sm:$0xff]
    %1643 = vmatprep.subr.mxu0 0.0
    %1644 = vmatpush1.msra.mxu0 %v1627
    %1645 = vmatprep.subr.mxu0 0.0
    %1646 = vmatpush1.msra.mxu0 %v1628
    %1647 = vmatprep.subr.mxu0 0.0
    %1648 = vmatpush1.msra.mxu0 %v1629
    %1649 = vmatprep.subr.mxu0 0.0
    %1650 = vmatpush1.msra.mxu0 %v1630
    %1651 = vmatprep.subr.mxu0 0.0
    %1652 = vmatpush1.msra.mxu0 %v1631
    %1653 = vmatprep.subr.mxu0 0.0
    %1654 = vmatpush1.msra.mxu0 %v1632
    %1655 = vmatprep.subr.mxu0 0.0
    %1656 = vmatpush1.msra.mxu0 %v1633
    %1657 = vmatprep.subr.mxu0 0.0
    %1658 = vmatpush1.msra.mxu0 %v1634
    %1659 = vmatprep.subr.mxu0 0.0
    %1660 = vmatpush1.msra.mxu0 %v1635
    %1661 = vmatprep.subr.mxu0 0.0
    %1662 = vmatpush1.msra.mxu0 %v1636
    %1663 = vmatprep.subr.mxu0 0.0
    %1664 = vmatpush1.msra.mxu0 %v1637
    %1665 = vmatprep.subr.mxu0 0.0
    %1666 = vmatpush1.msra.mxu0 %v1638
    %1667 = vmatprep.subr.mxu0 0.0
    %1668 = vmatpush1.msra.mxu0 %v1639
    %1669 = vmatprep.subr.mxu0 0.0
    %1670 = vmatpush1.msra.mxu0 %v1640
    %1671 = vmatprep.subr.mxu0 0.0
    %1672 = vmatpush1.msra.mxu0 %v1641
    %1673 = vmatprep.subr.mxu0 0.0
    %1674 = vmatpush1.msra.mxu0 %v1642
    %1675 = vmatprep.subr.mxu0 0.0
    %1676 = vmatpush1.msra.mxu0 0.0
    %1677 = vmatprep.subr.mxu0 0.0
    %1678 = vmatpush1.msra.mxu0 0.0
    %1679 = vmatprep.subr.mxu0 0.0
    %1680 = vmatpush1.msra.mxu0 0.0
    %1681 = vmatprep.subr.mxu0 0.0
    %1682 = vmatpush1.msra.mxu0 0.0
    %1683 = vmatprep.subr.mxu0 0.0
    %1684 = vmatpush1.msra.mxu0 0.0
    %1685 = vmatprep.subr.mxu0 0.0
    %1686 = vmatpush1.msra.mxu0 0.0
    %1687 = vmatprep.subr.mxu0 0.0
    %1688 = vmatpush1.msra.mxu0 0.0
    %1689 = vmatprep.subr.mxu0 0.0
    %1690 = vmatpush1.msra.mxu0 0.0
    %1691 = vmatprep.subr.mxu0 0.0
    %1692 = vmatpush1.msra.mxu0 0.0
    %1693 = vmatprep.subr.mxu0 0.0
    %1694 = vmatpush1.msra.mxu0 0.0
    %1695 = vmatprep.subr.mxu0 0.0
    %1696 = vmatpush1.msra.mxu0 0.0
    %1697 = vmatprep.subr.mxu0 0.0
    %1698 = vmatpush1.msra.mxu0 0.0
    %1699 = vmatprep.subr.mxu0 0.0
    %1700 = vmatpush1.msra.mxu0 0.0
    %1701 = vmatprep.subr.mxu0 0.0
    %1702 = vmatpush1.msra.mxu0 0.0
    %1703 = vmatprep.subr.mxu0 0.0
    %1704 = vmatpush1.msra.mxu0 0.0
    %1705 = vmatprep.subr.mxu0 0.0
    %1706 = vmatpush1.msra.mxu0 0.0
    %1707 = vmatprep.mubr.f32.mxu0 0.0
    %1708 = vmatmul.mubr.f32.gmra.mrb[0].mxu0 %v1625
    %v1709 = vpop.f32.mrb[0].mxu0
    %v1710 = vadd.f32 0.0, %v1709
    %v1711 = vpop.f32.mrb[0].mxu0
    %1712 = vdwg.mxu0
    %v1713 = vmul.f32 %v1710, 0.5
    %v1714 = vmul.f32 %v1710, 0.70710677
    %v1715 = verf.f32.pop %v1714
    %v1716 = vadd.f32 %v1715, 1.0
    %v1717 = vmul.f32 %v1713, %v1716
    %s1718 = scalar_lea.vmem %s2, 256
    %v1719 = vld [vmem:[%s1718] sm:$0xff]
    %v1720 = vld [vmem:[%s1718 + $0x8] sm:$0xff]
    %v1721 = vld [vmem:[%s1718 + $0x10] sm:$0xff]
    %v1722 = vld [vmem:[%s1718 + $0x18] sm:$0xff]
    %v1723 = vld [vmem:[%s1718 + $0x20] sm:$0xff]
    %v1724 = vld [vmem:[%s1718 + $0x28] sm:$0xff]
    %v1725 = vld [vmem:[%s1718 + $0x30] sm:$0xff]
    %v1726 = vld [vmem:[%s1718 + $0x38] sm:$0xff]
    %v1727 = vld [vmem:[%s1718 + $0x40] sm:$0xff]
    %v1728 = vld [vmem:[%s1718 + $0x48] sm:$0xff]
    %v1729 = vld [vmem:[%s1718 + $0x50] sm:$0xff]
    %v1730 = vld [vmem:[%s1718 + $0x58] sm:$0xff]
    %v1731 = vld [vmem:[%s1718 + $0x60] sm:$0xff]
    %v1732 = vld [vmem:[%s1718 + $0x68] sm:$0xff]
    %v1733 = vld [vmem:[%s1718 + $0x70] sm:$0xff]
    %v1734 = vld [vmem:[%s1718 + $0x78] sm:$0xff]
    %1735 = vmatprep.subr.mxu0 0.0
    %1736 = vmatpush1.msra.mxu0 %v1719
    %1737 = vmatprep.subr.mxu0 0.0
    %1738 = vmatpush1.msra.mxu0 %v1720
    %1739 = vmatprep.subr.mxu0 0.0
    %1740 = vmatpush1.msra.mxu0 %v1721
    %1741 = vmatprep.subr.mxu0 0.0
    %1742 = vmatpush1.msra.mxu0 %v1722
    %1743 = vmatprep.subr.mxu0 0.0
    %1744 = vmatpush1.msra.mxu0 %v1723
    %1745 = vmatprep.subr.mxu0 0.0
    %1746 = vmatpush1.msra.mxu0 %v1724
    %1747 = vmatprep.subr.mxu0 0.0
    %1748 = vmatpush1.msra.mxu0 %v1725
    %1749 = vmatprep.subr.mxu0 0.0
    %1750 = vmatpush1.msra.mxu0 %v1726
    %1751 = vmatprep.subr.mxu0 0.0
    %1752 = vmatpush1.msra.mxu0 %v1727
    %1753 = vmatprep.subr.mxu0 0.0
    %1754 = vmatpush1.msra.mxu0 %v1728
    %1755 = vmatprep.subr.mxu0 0.0
    %1756 = vmatpush1.msra.mxu0 %v1729
    %1757 = vmatprep.subr.mxu0 0.0
    %1758 = vmatpush1.msra.mxu0 %v1730
    %1759 = vmatprep.subr.mxu0 0.0
    %1760 = vmatpush1.msra.mxu0 %v1731
    %1761 = vmatprep.subr.mxu0 0.0
    %1762 = vmatpush1.msra.mxu0 %v1732
    %1763 = vmatprep.subr.mxu0 0.0
    %1764 = vmatpush1.msra.mxu0 %v1733
    %1765 = vmatprep.subr.mxu0 0.0
    %1766 = vmatpush1.msra.mxu0 %v1734
    %1767 = vmatprep.subr.mxu0 0.0
    %1768 = vmatpush1.msra.mxu0 0.0
    %1769 = vmatprep.subr.mxu0 0.0
    %1770 = vmatpush1.msra.mxu0 0.0
    %1771 = vmatprep.subr.mxu0 0.0
    %1772 = vmatpush1.msra.mxu0 0.0
    %1773 = vmatprep.subr.mxu0 0.0
    %1774 = vmatpush1.msra.mxu0 0.0
    %1775 = vmatprep.subr.mxu0 0.0
    %1776 = vmatpush1.msra.mxu0 0.0
    %1777 = vmatprep.subr.mxu0 0.0
    %1778 = vmatpush1.msra.mxu0 0.0
    %1779 = vmatprep.subr.mxu0 0.0
    %1780 = vmatpush1.msra.mxu0 0.0
    %1781 = vmatprep.subr.mxu0 0.0
    %1782 = vmatpush1.msra.mxu0 0.0
    %1783 = vmatprep.subr.mxu0 0.0
    %1784 = vmatpush1.msra.mxu0 0.0
    %1785 = vmatprep.subr.mxu0 0.0
    %1786 = vmatpush1.msra.mxu0 0.0
    %1787 = vmatprep.subr.mxu0 0.0
    %1788 = vmatpush1.msra.mxu0 0.0
    %1789 = vmatprep.subr.mxu0 0.0
    %1790 = vmatpush1.msra.mxu0 0.0
    %1791 = vmatprep.subr.mxu0 0.0
    %1792 = vmatpush1.msra.mxu0 0.0
    %1793 = vmatprep.subr.mxu0 0.0
    %1794 = vmatpush1.msra.mxu0 0.0
    %1795 = vmatprep.subr.mxu0 0.0
    %1796 = vmatpush1.msra.mxu0 0.0
    %1797 = vmatprep.subr.mxu0 0.0
    %1798 = vmatpush1.msra.mxu0 0.0
    %1799 = vmatprep.mubr.f32.mxu0 0.0
    %1800 = vmatmul.mubr.f32.gmra.mrb[0].mxu0 %v1717
    %v1801 = vpop.f32.mrb[0].mxu0
    %v1802 = vadd.f32 0.0, %v1801
    %v1803 = vpop.f32.mrb[0].mxu0
    %1804 = vdwg.mxu0
    %v1805 = vmul.f32 %v1802, 0.5
    %v1806 = vmul.f32 %v1802, 0.70710677
    %v1807 = verf.f32.pop %v1806
    %v1808 = vadd.f32 %v1807, 1.0
    %v1809 = vmul.f32 %v1805, %v1808
    %s1810 = scalar_lea.vmem %s2, 384
    %v1811 = vld [vmem:[%s1810] sm:$0xff]
    %v1812 = vld [vmem:[%s1810 + $0x8] sm:$0xff]
    %v1813 = vld [vmem:[%s1810 + $0x10] sm:$0xff]
    %v1814 = vld [vmem:[%s1810 + $0x18] sm:$0xff]
    %v1815 = vld [vmem:[%s1810 + $0x20] sm:$0xff]
    %v1816 = vld [vmem:[%s1810 + $0x28] sm:$0xff]
    %v1817 = vld [vmem:[%s1810 + $0x30] sm:$0xff]
    %v1818 = vld [vmem:[%s1810 + $0x38] sm:$0xff]
    %v1819 = vld [vmem:[%s1810 + $0x40] sm:$0xff]
    %v1820 = vld [vmem:[%s1810 + $0x48] sm:$0xff]
    %v1821 = vld [vmem:[%s1810 + $0x50] sm:$0xff]
    %v1822 = vld [vmem:[%s1810 + $0x58] sm:$0xff]
    %v1823 = vld [vmem:[%s1810 + $0x60] sm:$0xff]
    %v1824 = vld [vmem:[%s1810 + $0x68] sm:$0xff]
    %v1825 = vld [vmem:[%s1810 + $0x70] sm:$0xff]
    %v1826 = vld [vmem:[%s1810 + $0x78] sm:$0xff]
    %1827 = vmatprep.subr.mxu0 0.0
    %1828 = vmatpush1.msra.mxu0 %v1811
    %1829 = vmatprep.subr.mxu0 0.0
    %1830 = vmatpush1.msra.mxu0 %v1812
    %1831 = vmatprep.subr.mxu0 0.0
    %1832 = vmatpush1.msra.mxu0 %v1813
    %1833 = vmatprep.subr.mxu0 0.0
    %1834 = vmatpush1.msra.mxu0 %v1814
    %1835 = vmatprep.subr.mxu0 0.0
    %1836 = vmatpush1.msra.mxu0 %v1815
    %1837 = vmatprep.subr.mxu0 0.0
    %1838 = vmatpush1.msra.mxu0 %v1816
    %1839 = vmatprep.subr.mxu0 0.0
    %1840 = vmatpush1.msra.mxu0 %v1817
    %1841 = vmatprep.subr.mxu0 0.0
    %1842 = vmatpush1.msra.mxu0 %v1818
    %1843 = vmatprep.subr.mxu0 0.0
    %1844 = vmatpush1.msra.mxu0 %v1819
    %1845 = vmatprep.subr.mxu0 0.0
    %1846 = vmatpush1.msra.mxu0 %v1820
    %1847 = vmatprep.subr.mxu0 0.0
    %1848 = vmatpush1.msra.mxu0 %v1821
    %1849 = vmatprep.subr.mxu0 0.0
    %1850 = vmatpush1.msra.mxu0 %v1822
    %1851 = vmatprep.subr.mxu0 0.0
    %1852 = vmatpush1.msra.mxu0 %v1823
    %1853 = vmatprep.subr.mxu0 0.0
    %1854 = vmatpush1.msra.mxu0 %v1824
    %1855 = vmatprep.subr.mxu0 0.0
    %1856 = vmatpush1.msra.mxu0 %v1825
    %1857 = vmatprep.subr.mxu0 0.0
    %1858 = vmatpush1.msra.mxu0 %v1826
    %1859 = vmatprep.subr.mxu0 0.0
    %1860 = vmatpush1.msra.mxu0 0.0
    %1861 = vmatprep.subr.mxu0 0.0
    %1862 = vmatpush1.msra.mxu0 0.0
    %1863 = vmatprep.subr.mxu0 0.0
    %1864 = vmatpush1.msra.mxu0 0.0
    %1865 = vmatprep.subr.mxu0 0.0
    %1866 = vmatpush1.msra.mxu0 0.0
    %1867 = vmatprep.subr.mxu0 0.0
    %1868 = vmatpush1.msra.mxu0 0.0
    %1869 = vmatprep.subr.mxu0 0.0
    %1870 = vmatpush1.msra.mxu0 0.0
    %1871 = vmatprep.subr.mxu0 0.0
    %1872 = vmatpush1.msra.mxu0 0.0
    %1873 = vmatprep.subr.mxu0 0.0
    %1874 = vmatpush1.msra.mxu0 0.0
    %1875 = vmatprep.subr.mxu0 0.0
    %1876 = vmatpush1.msra.mxu0 0.0
    %1877 = vmatprep.subr.mxu0 0.0
    %1878 = vmatpush1.msra.mxu0 0.0
    %1879 = vmatprep.subr.mxu0 0.0
    %1880 = vmatpush1.msra.mxu0 0.0
    %1881 = vmatprep.subr.mxu0 0.0
    %1882 = vmatpush1.msra.mxu0 0.0
    %1883 = vmatprep.subr.mxu0 0.0
    %1884 = vmatpush1.msra.mxu0 0.0
    %1885 = vmatprep.subr.mxu0 0.0
    %1886 = vmatpush1.msra.mxu0 0.0
    %1887 = vmatprep.subr.mxu0 0.0
    %1888 = vmatpush1.msra.mxu0 0.0
    %1889 = vmatprep.subr.mxu0 0.0
    %1890 = vmatpush1.msra.mxu0 0.0
    %1891 = vmatprep.mubr.f32.mxu0 0.0
    %1892 = vmatmul.mubr.f32.gmra.mrb[0].mxu0 %v1809
    %v1893 = vpop.f32.mrb[0].mxu0
    %v1894 = vadd.f32 0.0, %v1893
    %v1895 = vpop.f32.mrb[0].mxu0
    %1896 = vdwg.mxu0
    %v1897 = vmul.f32 %v1894, 0.5
    %v1898 = vmul.f32 %v1894, 0.70710677
    %v1899 = verf.f32.pop %v1898
    %v1900 = vadd.f32 %v1899, 1.0
    %v1901 = vmul.f32 %v1897, %v1900
    %s1902 = scalar_lea.vmem %s2, 512
    %v1903 = vld [vmem:[%s1902] sm:$0xff]
    %v1904 = vld [vmem:[%s1902 + $0x8] sm:$0xff]
    %v1905 = vld [vmem:[%s1902 + $0x10] sm:$0xff]
    %v1906 = vld [vmem:[%s1902 + $0x18] sm:$0xff]
    %v1907 = vld [vmem:[%s1902 + $0x20] sm:$0xff]
    %v1908 = vld [vmem:[%s1902 + $0x28] sm:$0xff]
    %v1909 = vld [vmem:[%s1902 + $0x30] sm:$0xff]
    %v1910 = vld [vmem:[%s1902 + $0x38] sm:$0xff]
    %v1911 = vld [vmem:[%s1902 + $0x40] sm:$0xff]
    %v1912 = vld [vmem:[%s1902 + $0x48] sm:$0xff]
    %v1913 = vld [vmem:[%s1902 + $0x50] sm:$0xff]
    %v1914 = vld [vmem:[%s1902 + $0x58] sm:$0xff]
    %v1915 = vld [vmem:[%s1902 + $0x60] sm:$0xff]
    %v1916 = vld [vmem:[%s1902 + $0x68] sm:$0xff]
    %v1917 = vld [vmem:[%s1902 + $0x70] sm:$0xff]
    %v1918 = vld [vmem:[%s1902 + $0x78] sm:$0xff]
    %1919 = vmatprep.subr.mxu0 0.0
    %1920 = vmatpush1.msra.mxu0 %v1903
    %1921 = vmatprep.subr.mxu0 0.0
    %1922 = vmatpush1.msra.mxu0 %v1904
    %1923 = vmatprep.subr.mxu0 0.0
    %1924 = vmatpush1.msra.mxu0 %v1905
    %1925 = vmatprep.subr.mxu0 0.0
    %1926 = vmatpush1.msra.mxu0 %v1906
    %1927 = vmatprep.subr.mxu0 0.0
    %1928 = vmatpush1.msra.mxu0 %v1907
    %1929 = vmatprep.subr.mxu0 0.0
    %1930 = vmatpush1.msra.mxu0 %v1908
    %1931 = vmatprep.subr.mxu0 0.0
    %1932 = vmatpush1.msra.mxu0 %v1909
    %1933 = vmatprep.subr.mxu0 0.0
    %1934 = vmatpush1.msra.mxu0 %v1910
    %1935 = vmatprep.subr.mxu0 0.0
    %1936 = vmatpush1.msra.mxu0 %v1911
    %1937 = vmatprep.subr.mxu0 0.0
    %1938 = vmatpush1.msra.mxu0 %v1912
    %1939 = vmatprep.subr.mxu0 0.0
    %1940 = vmatpush1.msra.mxu0 %v1913
    %1941 = vmatprep.subr.mxu0 0.0
    %1942 = vmatpush1.msra.mxu0 %v1914
    %1943 = vmatprep.subr.mxu0 0.0
    %1944 = vmatpush1.msra.mxu0 %v1915
    %1945 = vmatprep.subr.mxu0 0.0
    %1946 = vmatpush1.msra.mxu0 %v1916
    %1947 = vmatprep.subr.mxu0 0.0
    %1948 = vmatpush1.msra.mxu0 %v1917
    %1949 = vmatprep.subr.mxu0 0.0
    %1950 = vmatpush1.msra.mxu0 %v1918
    %1951 = vmatprep.subr.mxu0 0.0
    %1952 = vmatpush1.msra.mxu0 0.0
    %1953 = vmatprep.subr.mxu0 0.0
    %1954 = vmatpush1.msra.mxu0 0.0
    %1955 = vmatprep.subr.mxu0 0.0
    %1956 = vmatpush1.msra.mxu0 0.0
    %1957 = vmatprep.subr.mxu0 0.0
    %1958 = vmatpush1.msra.mxu0 0.0
    %1959 = vmatprep.subr.mxu0 0.0
    %1960 = vmatpush1.msra.mxu0 0.0
    %1961 = vmatprep.subr.mxu0 0.0
    %1962 = vmatpush1.msra.mxu0 0.0
    %1963 = vmatprep.subr.mxu0 0.0
    %1964 = vmatpush1.msra.mxu0 0.0
    %1965 = vmatprep.subr.mxu0 0.0
    %1966 = vmatpush1.msra.mxu0 0.0
    %1967 = vmatprep.subr.mxu0 0.0
    %1968 = vmatpush1.msra.mxu0 0.0
    %1969 = vmatprep.subr.mxu0 0.0
    %1970 = vmatpush1.msra.mxu0 0.0
    %1971 = vmatprep.subr.mxu0 0.0
    %1972 = vmatpush1.msra.mxu0 0.0
    %1973 = vmatprep.subr.mxu0 0.0
    %1974 = vmatpush1.msra.mxu0 0.0
    %1975 = vmatprep.subr.mxu0 0.0
    %1976 = vmatpush1.msra.mxu0 0.0
    %1977 = vmatprep.subr.mxu0 0.0
    %1978 = vmatpush1.msra.mxu0 0.0
    %1979 = vmatprep.subr.mxu0 0.0
    %1980 = vmatpush1.msra.mxu0 0.0
    %1981 = vmatprep.subr.mxu0 0.0
    %1982 = vmatpush1.msra.mxu0 0.0
    %1983 = vmatprep.mubr.f32.mxu0 0.0
    %1984 = vmatmul.mubr.f32.gmra.mrb[0].mxu0 %v1901
    %v1985 = vpop.f32.mrb[0].mxu0
    %v1986 = vadd.f32 0.0, %v1985
    %v1987 = vpop.f32.mrb[0].mxu0
    %1988 = vdwg.mxu0
    %v1989 = vmul.f32 %v1986, 0.5
    %v1990 = vmul.f32 %v1986, 0.70710677
    %v1991 = verf.f32.pop %v1990
    %v1992 = vadd.f32 %v1991, 1.0
    %v1993 = vmul.f32 %v1989, %v1992
    %s1994 = scalar_lea.vmem %s2, 640
    %v1995 = vld [vmem:[%s1994] sm:$0xff]
    %v1996 = vld [vmem:[%s1994 + $0x8] sm:$0xff]
    %v1997 = vld [vmem:[%s1994 + $0x10] sm:$0xff]
    %v1998 = vld [vmem:[%s1994 + $0x18] sm:$0xff]
    %v1999 = vld [vmem:[%s1994 + $0x20] sm:$0xff]
    %v2000 = vld [vmem:[%s1994 + $0x28] sm:$0xff]
    %v2001 = vld [vmem:[%s1994 + $0x30] sm:$0xff]
    %v2002 = vld [vmem:[%s1994 + $0x38] sm:$0xff]
    %v2003 = vld [vmem:[%s1994 + $0x40] sm:$0xff]
    %v2004 = vld [vmem:[%s1994 + $0x48] sm:$0xff]
    %v2005 = vld [vmem:[%s1994 + $0x50] sm:$0xff]
    %v2006 = vld [vmem:[%s1994 + $0x58] sm:$0xff]
    %v2007 = vld [vmem:[%s1994 + $0x60] sm:$0xff]
    %v2008 = vld [vmem:[%s1994 + $0x68] sm:$0xff]
    %v2009 = vld [vmem:[%s1994 + $0x70] sm:$0xff]
    %v2010 = vld [vmem:[%s1994 + $0x78] sm:$0xff]
    %2011 = vmatprep.subr.mxu0 0.0
    %2012 = vmatpush1.msra.mxu0 %v1995
    %2013 = vmatprep.subr.mxu0 0.0
    %2014 = vmatpush1.msra.mxu0 %v1996
    %2015 = vmatprep.subr.mxu0 0.0
    %2016 = vmatpush1.msra.mxu0 %v1997
    %2017 = vmatprep.subr.mxu0 0.0
    %2018 = vmatpush1.msra.mxu0 %v1998
    %2019 = vmatprep.subr.mxu0 0.0
    %2020 = vmatpush1.msra.mxu0 %v1999
    %2021 = vmatprep.subr.mxu0 0.0
    %2022 = vmatpush1.msra.mxu0 %v2000
    %2023 = vmatprep.subr.mxu0 0.0
    %2024 = vmatpush1.msra.mxu0 %v2001
    %2025 = vmatprep.subr.mxu0 0.0
    %2026 = vmatpush1.msra.mxu0 %v2002
    %2027 = vmatprep.subr.mxu0 0.0
    %2028 = vmatpush1.msra.mxu0 %v2003
    %2029 = vmatprep.subr.mxu0 0.0
    %2030 = vmatpush1.msra.mxu0 %v2004
    %2031 = vmatprep.subr.mxu0 0.0
    %2032 = vmatpush1.msra.mxu0 %v2005
    %2033 = vmatprep.subr.mxu0 0.0
    %2034 = vmatpush1.msra.mxu0 %v2006
    %2035 = vmatprep.subr.mxu0 0.0
    %2036 = vmatpush1.msra.mxu0 %v2007
    %2037 = vmatprep.subr.mxu0 0.0
    %2038 = vmatpush1.msra.mxu0 %v2008
    %2039 = vmatprep.subr.mxu0 0.0
    %2040 = vmatpush1.msra.mxu0 %v2009
    %2041 = vmatprep.subr.mxu0 0.0
    %2042 = vmatpush1.msra.mxu0 %v2010
    %2043 = vmatprep.subr.mxu0 0.0
    %2044 = vmatpush1.msra.mxu0 0.0
    %2045 = vmatprep.subr.mxu0 0.0
    %2046 = vmatpush1.msra.mxu0 0.0
    %2047 = vmatprep.subr.mxu0 0.0
    %2048 = vmatpush1.msra.mxu0 0.0
    %2049 = vmatprep.subr.mxu0 0.0
    %2050 = vmatpush1.msra.mxu0 0.0
    %2051 = vmatprep.subr.mxu0 0.0
    %2052 = vmatpush1.msra.mxu0 0.0
    %2053 = vmatprep.subr.mxu0 0.0
    %2054 = vmatpush1.msra.mxu0 0.0
    %2055 = vmatprep.subr.mxu0 0.0
    %2056 = vmatpush1.msra.mxu0 0.0
    %2057 = vmatprep.subr.mxu0 0.0
    %2058 = vmatpush1.msra.mxu0 0.0
    %2059 = vmatprep.subr.mxu0 0.0
    %2060 = vmatpush1.msra.mxu0 0.0
    %2061 = vmatprep.subr.mxu0 0.0
    %2062 = vmatpush1.msra.mxu0 0.0
    %2063 = vmatprep.subr.mxu0 0.0
    %2064 = vmatpush1.msra.mxu0 0.0
    %2065 = vmatprep.subr.mxu0 0.0
    %2066 = vmatpush1.msra.mxu0 0.0
    %2067 = vmatprep.subr.mxu0 0.0
    %2068 = vmatpush1.msra.mxu0 0.0
    %2069 = vmatprep.subr.mxu0 0.0
    %2070 = vmatpush1.msra.mxu0 0.0
    %2071 = vmatprep.subr.mxu0 0.0
    %2072 = vmatpush1.msra.mxu0 0.0
    %2073 = vmatprep.subr.mxu0 0.0
    %2074 = vmatpush1.msra.mxu0 0.0
    %2075 = vmatprep.mubr.f32.mxu0 0.0
    %2076 = vmatmul.mubr.f32.gmra.mrb[0].mxu0 %v1993
    %v2077 = vpop.f32.mrb[0].mxu0
    %v2078 = vadd.f32 0.0, %v2077
    %v2079 = vpop.f32.mrb[0].mxu0
    %2080 = vdwg.mxu0
    %v2081 = vmul.f32 %v2078, 0.5
    %v2082 = vmul.f32 %v2078, 0.70710677
    %v2083 = verf.f32.pop %v2082
    %v2084 = vadd.f32 %v2083, 1.0
    %v2085 = vmul.f32 %v2081, %v2084
    %s2086 = scalar_lea.vmem %s2, 768
    %v2087 = vld [vmem:[%s2086] sm:$0xff]
    %v2088 = vld [vmem:[%s2086 + $0x8] sm:$0xff]
    %v2089 = vld [vmem:[%s2086 + $0x10] sm:$0xff]
    %v2090 = vld [vmem:[%s2086 + $0x18] sm:$0xff]
    %v2091 = vld [vmem:[%s2086 + $0x20] sm:$0xff]
    %v2092 = vld [vmem:[%s2086 + $0x28] sm:$0xff]
    %v2093 = vld [vmem:[%s2086 + $0x30] sm:$0xff]
    %v2094 = vld [vmem:[%s2086 + $0x38] sm:$0xff]
    %v2095 = vld [vmem:[%s2086 + $0x40] sm:$0xff]
    %v2096 = vld [vmem:[%s2086 + $0x48] sm:$0xff]
    %v2097 = vld [vmem:[%s2086 + $0x50] sm:$0xff]
    %v2098 = vld [vmem:[%s2086 + $0x58] sm:$0xff]
    %v2099 = vld [vmem:[%s2086 + $0x60] sm:$0xff]
    %v2100 = vld [vmem:[%s2086 + $0x68] sm:$0xff]
    %v2101 = vld [vmem:[%s2086 + $0x70] sm:$0xff]
    %v2102 = vld [vmem:[%s2086 + $0x78] sm:$0xff]
    %2103 = vmatprep.subr.mxu0 0.0
    %2104 = vmatpush1.msra.mxu0 %v2087
    %2105 = vmatprep.subr.mxu0 0.0
    %2106 = vmatpush1.msra.mxu0 %v2088
    %2107 = vmatprep.subr.mxu0 0.0
    %2108 = vmatpush1.msra.mxu0 %v2089
    %2109 = vmatprep.subr.mxu0 0.0
    %2110 = vmatpush1.msra.mxu0 %v2090
    %2111 = vmatprep.subr.mxu0 0.0
    %2112 = vmatpush1.msra.mxu0 %v2091
    %2113 = vmatprep.subr.mxu0 0.0
    %2114 = vmatpush1.msra.mxu0 %v2092
    %2115 = vmatprep.subr.mxu0 0.0
    %2116 = vmatpush1.msra.mxu0 %v2093
    %2117 = vmatprep.subr.mxu0 0.0
    %2118 = vmatpush1.msra.mxu0 %v2094
    %2119 = vmatprep.subr.mxu0 0.0
    %2120 = vmatpush1.msra.mxu0 %v2095
    %2121 = vmatprep.subr.mxu0 0.0
    %2122 = vmatpush1.msra.mxu0 %v2096
    %2123 = vmatprep.subr.mxu0 0.0
    %2124 = vmatpush1.msra.mxu0 %v2097
    %2125 = vmatprep.subr.mxu0 0.0
    %2126 = vmatpush1.msra.mxu0 %v2098
    %2127 = vmatprep.subr.mxu0 0.0
    %2128 = vmatpush1.msra.mxu0 %v2099
    %2129 = vmatprep.subr.mxu0 0.0
    %2130 = vmatpush1.msra.mxu0 %v2100
    %2131 = vmatprep.subr.mxu0 0.0
    %2132 = vmatpush1.msra.mxu0 %v2101
    %2133 = vmatprep.subr.mxu0 0.0
    %2134 = vmatpush1.msra.mxu0 %v2102
    %2135 = vmatprep.subr.mxu0 0.0
    %2136 = vmatpush1.msra.mxu0 0.0
    %2137 = vmatprep.subr.mxu0 0.0
    %2138 = vmatpush1.msra.mxu0 0.0
    %2139 = vmatprep.subr.mxu0 0.0
    %2140 = vmatpush1.msra.mxu0 0.0
    %2141 = vmatprep.subr.mxu0 0.0
    %2142 = vmatpush1.msra.mxu0 0.0
    %2143 = vmatprep.subr.mxu0 0.0
    %2144 = vmatpush1.msra.mxu0 0.0
    %2145 = vmatprep.subr.mxu0 0.0
    %2146 = vmatpush1.msra.mxu0 0.0
    %2147 = vmatprep.subr.mxu0 0.0
    %2148 = vmatpush1.msra.mxu0 0.0
    %2149 = vmatprep.subr.mxu0 0.0
    %2150 = vmatpush1.msra.mxu0 0.0
    %2151 = vmatprep.subr.mxu0 0.0
    %2152 = vmatpush1.msra.mxu0 0.0
    %2153 = vmatprep.subr.mxu0 0.0
    %2154 = vmatpush1.msra.mxu0 0.0
    %2155 = vmatprep.subr.mxu0 0.0
    %2156 = vmatpush1.msra.mxu0 0.0
    %2157 = vmatprep.subr.mxu0 0.0
    %2158 = vmatpush1.msra.mxu0 0.0
    %2159 = vmatprep.subr.mxu0 0.0
    %2160 = vmatpush1.msra.mxu0 0.0
    %2161 = vmatprep.subr.mxu0 0.0
    %2162 = vmatpush1.msra.mxu0 0.0
    %2163 = vmatprep.subr.mxu0 0.0
    %2164 = vmatpush1.msra.mxu0 0.0
    %2165 = vmatprep.subr.mxu0 0.0
    %2166 = vmatpush1.msra.mxu0 0.0
    %2167 = vmatprep.mubr.f32.mxu0 0.0
    %2168 = vmatmul.mubr.f32.gmra.mrb[0].mxu0 %v2085
    %v2169 = vpop.f32.mrb[0].mxu0
    %v2170 = vadd.f32 0.0, %v2169
    %v2171 = vpop.f32.mrb[0].mxu0
    %2172 = vdwg.mxu0
    %v2173 = vmul.f32 %v2170, 0.5
    %v2174 = vmul.f32 %v2170, 0.70710677
    %v2175 = verf.f32.pop %v2174
    %v2176 = vadd.f32 %v2175, 1.0
    %v2177 = vmul.f32 %v2173, %v2176
    %s2178 = scalar_lea.vmem %s2, 896
    %v2179 = vld [vmem:[%s2178] sm:$0xff]
    %v2180 = vld [vmem:[%s2178 + $0x8] sm:$0xff]
    %v2181 = vld [vmem:[%s2178 + $0x10] sm:$0xff]
    %v2182 = vld [vmem:[%s2178 + $0x18] sm:$0xff]
    %v2183 = vld [vmem:[%s2178 + $0x20] sm:$0xff]
    %v2184 = vld [vmem:[%s2178 + $0x28] sm:$0xff]
    %v2185 = vld [vmem:[%s2178 + $0x30] sm:$0xff]
    %v2186 = vld [vmem:[%s2178 + $0x38] sm:$0xff]
    %v2187 = vld [vmem:[%s2178 + $0x40] sm:$0xff]
    %v2188 = vld [vmem:[%s2178 + $0x48] sm:$0xff]
    %v2189 = vld [vmem:[%s2178 + $0x50] sm:$0xff]
    %v2190 = vld [vmem:[%s2178 + $0x58] sm:$0xff]
    %v2191 = vld [vmem:[%s2178 + $0x60] sm:$0xff]
    %v2192 = vld [vmem:[%s2178 + $0x68] sm:$0xff]
    %v2193 = vld [vmem:[%s2178 + $0x70] sm:$0xff]
    %v2194 = vld [vmem:[%s2178 + $0x78] sm:$0xff]
    %2195 = vmatprep.subr.mxu0 0.0
    %2196 = vmatpush1.msra.mxu0 %v2179
    %2197 = vmatprep.subr.mxu0 0.0
    %2198 = vmatpush1.msra.mxu0 %v2180
    %2199 = vmatprep.subr.mxu0 0.0
    %2200 = vmatpush1.msra.mxu0 %v2181
    %2201 = vmatprep.subr.mxu0 0.0
    %2202 = vmatpush1.msra.mxu0 %v2182
    %2203 = vmatprep.subr.mxu0 0.0
    %2204 = vmatpush1.msra.mxu0 %v2183
    %2205 = vmatprep.subr.mxu0 0.0
    %2206 = vmatpush1.msra.mxu0 %v2184
    %2207 = vmatprep.subr.mxu0 0.0
    %2208 = vmatpush1.msra.mxu0 %v2185
    %2209 = vmatprep.subr.mxu0 0.0
    %2210 = vmatpush1.msra.mxu0 %v2186
    %2211 = vmatprep.subr.mxu0 0.0
    %2212 = vmatpush1.msra.mxu0 %v2187
    %2213 = vmatprep.subr.mxu0 0.0
    %2214 = vmatpush1.msra.mxu0 %v2188
    %2215 = vmatprep.subr.mxu0 0.0
    %2216 = vmatpush1.msra.mxu0 %v2189
    %2217 = vmatprep.subr.mxu0 0.0
    %2218 = vmatpush1.msra.mxu0 %v2190
    %2219 = vmatprep.subr.mxu0 0.0
    %2220 = vmatpush1.msra.mxu0 %v2191
    %2221 = vmatprep.subr.mxu0 0.0
    %2222 = vmatpush1.msra.mxu0 %v2192
    %2223 = vmatprep.subr.mxu0 0.0
    %2224 = vmatpush1.msra.mxu0 %v2193
    %2225 = vmatprep.subr.mxu0 0.0
    %2226 = vmatpush1.msra.mxu0 %v2194
    %2227 = vmatprep.subr.mxu0 0.0
    %2228 = vmatpush1.msra.mxu0 0.0
    %2229 = vmatprep.subr.mxu0 0.0
    %2230 = vmatpush1.msra.mxu0 0.0
    %2231 = vmatprep.subr.mxu0 0.0
    %2232 = vmatpush1.msra.mxu0 0.0
    %2233 = vmatprep.subr.mxu0 0.0
    %2234 = vmatpush1.msra.mxu0 0.0
    %2235 = vmatprep.subr.mxu0 0.0
    %2236 = vmatpush1.msra.mxu0 0.0
    %2237 = vmatprep.subr.mxu0 0.0
    %2238 = vmatpush1.msra.mxu0 0.0
    %2239 = vmatprep.subr.mxu0 0.0
    %2240 = vmatpush1.msra.mxu0 0.0
    %2241 = vmatprep.subr.mxu0 0.0
    %2242 = vmatpush1.msra.mxu0 0.0
    %2243 = vmatprep.subr.mxu0 0.0
    %2244 = vmatpush1.msra.mxu0 0.0
    %2245 = vmatprep.subr.mxu0 0.0
    %2246 = vmatpush1.msra.mxu0 0.0
    %2247 = vmatprep.subr.mxu0 0.0
    %2248 = vmatpush1.msra.mxu0 0.0
    %2249 = vmatprep.subr.mxu0 0.0
    %2250 = vmatpush1.msra.mxu0 0.0
    %2251 = vmatprep.subr.mxu0 0.0
    %2252 = vmatpush1.msra.mxu0 0.0
    %2253 = vmatprep.subr.mxu0 0.0
    %2254 = vmatpush1.msra.mxu0 0.0
    %2255 = vmatprep.subr.mxu0 0.0
    %2256 = vmatpush1.msra.mxu0 0.0
    %2257 = vmatprep.subr.mxu0 0.0
    %2258 = vmatpush1.msra.mxu0 0.0
    %2259 = vmatprep.mubr.f32.mxu0 0.0
    %2260 = vmatmul.mubr.f32.gmra.mrb[0].mxu0 %v2177
    %v2261 = vpop.f32.mrb[0].mxu0
    %v2262 = vadd.f32 0.0, %v2261
    %v2263 = vpop.f32.mrb[0].mxu0
    %2264 = vdwg.mxu0
    %v2265 = vmul.f32 %v2262, 0.5
    %v2266 = vmul.f32 %v2262, 0.70710677
    %v2267 = verf.f32.pop %v2266
    %v2268 = vadd.f32 %v2267, 1.0
    %v2269 = vmul.f32 %v2265, %v2268
    %v2270 = vld [vmem:[%s3] sm:$0xff]
    %v2271 = vld [vmem:[%s3 + $0x8] sm:$0xff]
    %v2272 = vld [vmem:[%s3 + $0x10] sm:$0xff]
    %v2273 = vld [vmem:[%s3 + $0x18] sm:$0xff]
    %v2274 = vld [vmem:[%s3 + $0x20] sm:$0xff]
    %v2275 = vld [vmem:[%s3 + $0x28] sm:$0xff]
    %v2276 = vld [vmem:[%s3 + $0x30] sm:$0xff]
    %v2277 = vld [vmem:[%s3 + $0x38] sm:$0xff]
    %v2278 = vld [vmem:[%s3 + $0x40] sm:$0xff]
    %v2279 = vld [vmem:[%s3 + $0x48] sm:$0xff]
    %v2280 = vld [vmem:[%s3 + $0x50] sm:$0xff]
    %v2281 = vld [vmem:[%s3 + $0x58] sm:$0xff]
    %v2282 = vld [vmem:[%s3 + $0x60] sm:$0xff]
    %v2283 = vld [vmem:[%s3 + $0x68] sm:$0xff]
    %v2284 = vld [vmem:[%s3 + $0x70] sm:$0xff]
    %v2285 = vld [vmem:[%s3 + $0x78] sm:$0xff]
    %2286 = vmatprep.subr.mxu0 0.0
    %2287 = vmatpush1.msra.mxu0 %v2270
    %2288 = vmatprep.subr.mxu0 0.0
    %2289 = vmatpush1.msra.mxu0 %v2271
    %2290 = vmatprep.subr.mxu0 0.0
    %2291 = vmatpush1.msra.mxu0 %v2272
    %2292 = vmatprep.subr.mxu0 0.0
    %2293 = vmatpush1.msra.mxu0 %v2273
    %2294 = vmatprep.subr.mxu0 0.0
    %2295 = vmatpush1.msra.mxu0 %v2274
    %2296 = vmatprep.subr.mxu0 0.0
    %2297 = vmatpush1.msra.mxu0 %v2275
    %2298 = vmatprep.subr.mxu0 0.0
    %2299 = vmatpush1.msra.mxu0 %v2276
    %2300 = vmatprep.subr.mxu0 0.0
    %2301 = vmatpush1.msra.mxu0 %v2277
    %2302 = vmatprep.subr.mxu0 0.0
    %2303 = vmatpush1.msra.mxu0 %v2278
    %2304 = vmatprep.subr.mxu0 0.0
    %2305 = vmatpush1.msra.mxu0 %v2279
    %2306 = vmatprep.subr.mxu0 0.0
    %2307 = vmatpush1.msra.mxu0 %v2280
    %2308 = vmatprep.subr.mxu0 0.0
    %2309 = vmatpush1.msra.mxu0 %v2281
    %2310 = vmatprep.subr.mxu0 0.0
    %2311 = vmatpush1.msra.mxu0 %v2282
    %2312 = vmatprep.subr.mxu0 0.0
    %2313 = vmatpush1.msra.mxu0 %v2283
    %2314 = vmatprep.subr.mxu0 0.0
    %2315 = vmatpush1.msra.mxu0 %v2284
    %2316 = vmatprep.subr.mxu0 0.0
    %2317 = vmatpush1.msra.mxu0 %v2285
    %2318 = vmatprep.subr.mxu0 0.0
    %2319 = vmatpush1.msra.mxu0 0.0
    %2320 = vmatprep.subr.mxu0 0.0
    %2321 = vmatpush1.msra.mxu0 0.0
    %2322 = vmatprep.subr.mxu0 0.0
    %2323 = vmatpush1.msra.mxu0 0.0
    %2324 = vmatprep.subr.mxu0 0.0
    %2325 = vmatpush1.msra.mxu0 0.0
    %2326 = vmatprep.subr.mxu0 0.0
    %2327 = vmatpush1.msra.mxu0 0.0
    %2328 = vmatprep.subr.mxu0 0.0
    %2329 = vmatpush1.msra.mxu0 0.0
    %2330 = vmatprep.subr.mxu0 0.0
    %2331 = vmatpush1.msra.mxu0 0.0
    %2332 = vmatprep.subr.mxu0 0.0
    %2333 = vmatpush1.msra.mxu0 0.0
    %2334 = vmatprep.subr.mxu0 0.0
    %2335 = vmatpush1.msra.mxu0 0.0
    %2336 = vmatprep.subr.mxu0 0.0
    %2337 = vmatpush1.msra.mxu0 0.0
    %2338 = vmatprep.subr.mxu0 0.0
    %2339 = vmatpush1.msra.mxu0 0.0
    %2340 = vmatprep.subr.mxu0 0.0
    %2341 = vmatpush1.msra.mxu0 0.0
    %2342 = vmatprep.subr.mxu0 0.0
    %2343 = vmatpush1.msra.mxu0 0.0
    %2344 = vmatprep.subr.mxu0 0.0
    %2345 = vmatpush1.msra.mxu0 0.0
    %2346 = vmatprep.subr.mxu0 0.0
    %2347 = vmatpush1.msra.mxu0 0.0
    %2348 = vmatprep.subr.mxu0 0.0
    %2349 = vmatpush1.msra.mxu0 0.0
    %2350 = vmatprep.mubr.f32.mxu0 0.0
    %2351 = vmatmul.mubr.f32.gmra.mrb[0].mxu0 %v2269
    %v2352 = vpop.f32.mrb[0].mxu0
    %v2353 = vadd.f32 0.0, %v2352
    %v2354 = vpop.f32.mrb[0].mxu0
    %2355 = vdwg.mxu0
    %2356 = vst [vmem:[#allocation2] sm:$0xff] %v2353
    // Predicated region
    $region18: #{dnn_forward.1} parent=1 // pred_check
      _
    $region19: #{dnn_forward.1} parent=1 // pred_check_branch
      %2358 = sbr.rel (0) target = $region21
    $region20: #{dnn_forward.1} parent=1 // pred_region
      %s2360 = ssub.s32 128, 32
      %2361 = vsyncadd [#allocation3], %s2360
      %s2362 = sshll.u32 [#allocation2], 4
      %s2363 = int_to_ptr.vmem [resolvable:$true] %s2362
      %2368 = dma.vmem_to_hbm [thread:$0]  %s2363, 32, %s4, [#allocation3], 32, 32, 2
    $region21: #{dnn_forward.1} parent=1 // pred_fallthru
      _
    // Predicated region
    $region22: #{dnn_forward.1} parent=1 // pred_check
      _
    $region23: #{dnn_forward.1} parent=1 // pred_check_branch
      %2370 = sbr.rel (0) target = $region25
    $region24: #{dnn_forward.1} parent=1 // pred_region
      %2371 = dma.done [#allocation3], 128
    $region25: #{dnn_forward.1} parent=1 // pred_fallthru
      _
    %2372 = vsyncpa [#allocation3], 1

</llo_original>
